<compile_context>
chip_gen: v5e
topology: v5e:2x2
jax: 0.10.0
libtpu: 0.0.40
codegen_flags: <defaults>
</compile_context>

<pallas_src>
import jax
import jax.numpy as jnp
from jax.experimental import pallas as pl
from jax.experimental.pallas import tpu as pltpu


# --------------------------------------------------------------------------
# Pallas kernel
# --------------------------------------------------------------------------
def _egcl_a2v_kernel(
    projr_ref, coord_ref, db_ref,              # per-node-tile streams (index i only)
    projv_ref, vnf_ref, vcoord_ref, inv_ref,   # per-(channel, graph) resident
    w1c_ref, w2_ref, b2_ref, wc1_ref, bc1_ref, wc2_ref,
    wn1a_ref, wn1b_ref, bn1_ref, wn2_ref, bn2_ref,   # weights (resident)
    out_vnf_ref, out_vcoord_ref,               # outputs (written at finalize)
    acc_h_ref, acc_t_ref,                      # [C, B, H] / [C, B, 3] f32 accumulators
):
    f32 = jnp.float32
    bf16 = jnp.bfloat16
    TN, H = projr_ref.shape
    C, B, _ = acc_h_ref.shape

    i = pl.program_id(0)          # node-tile (reduction axis)
    c = pl.program_id(1)          # virtual channel (innermost -> tile reuse)
    last = (i == pl.num_programs(0) - 1) & (c == pl.num_programs(1) - 1)

    def silu(x):
        return x * jax.nn.sigmoid(x)

    @pl.when((i == 0) & (c == 0))
    def _init():
        acc_h_ref[...] = jnp.zeros_like(acc_h_ref)
        acc_t_ref[...] = jnp.zeros_like(acc_t_ref)

    # ---- per-(node-tile, channel) edge model ----
    db = db_ref[...]                                                    # [TN, 1] int32
    onehot = (db == jax.lax.broadcasted_iota(jnp.int32, (TN, B), 1)
              ).astype(f32)                                             # [TN, B]

    projv_c = projv_ref[c]                                              # [B, H]
    vcoord_c = vcoord_ref[c]                                            # [B, 3]

    # gather-by-matmul: exact row gather since onehot rows are {0,1} with one 1
    feat_v = jnp.dot(onehot, projv_c, preferred_element_type=f32)       # [TN, H]
    vdiff = jnp.dot(onehot, vcoord_c, preferred_element_type=f32) \
        - coord_ref[...]                                                # [TN, 3]
    radial = jnp.sqrt(jnp.sum(vdiff * vdiff, axis=-1, keepdims=True))   # [TN, 1]

    # edge_mlp (first linear layer hoisted to the wrapper; add radial term)
    h = silu(projr_ref[...] + feat_v + radial * w1c_ref[...])           # [TN, H]
    edge = silu(jnp.dot(h.astype(bf16), w2_ref[...],
                        preferred_element_type=f32) + b2_ref[...])      # [TN, H]

    # coord_mlp; Linear(H, 1) as VPU multiply + lane reduction
    c1 = silu(jnp.dot(edge.astype(bf16), wc1_ref[...],
                      preferred_element_type=f32) + bc1_ref[...])       # [TN, H]
    c2 = jnp.sum(c1 * wc2_ref[...], axis=-1, keepdims=True)             # [TN, 1]
    trans = vdiff * c2                                                  # [TN, 3]

    # ---- per-graph sum pooling for this (tile, channel): onehot^T @ {...} ----
    dn = (((0,), (0,)), ((), ()))
    acc_h_ref[c] += jax.lax.dot_general(onehot, edge, dn,
                                        preferred_element_type=f32)     # [B, H]
    acc_t_ref[c] += jax.lax.dot_general(onehot, trans, dn,
                                        preferred_element_type=f32)     # [B, 3]

    # ---- finalize: mean, coord update, node_mlp + residual ----
    @pl.when(last)
    def _finalize():
        inv = inv_ref[...]                                              # [B, 1]
        for cc in range(C):                                             # static, small C
            edge_agg = acc_h_ref[cc] * inv                              # [B, H]
            out_vcoord_ref[cc] = vcoord_ref[cc] + acc_t_ref[cc] * inv   # [B, 3]
            vnf = vnf_ref[cc]                                           # [B, H]
            n1 = silu(jnp.dot(vnf, wn1a_ref[...], preferred_element_type=f32)
                      + jnp.dot(edge_agg, wn1b_ref[...], preferred_element_type=f32)
                      + bn1_ref[...])
            n2 = jnp.dot(n1, wn2_ref[...], preferred_element_type=f32) + bn2_ref[...]
            out_vnf_ref[cc] = vnf + n2                                  # residual


# --------------------------------------------------------------------------
# Wrapper: layout glue + hoisted first-layer projections
# --------------------------------------------------------------------------
def egcl_a2v_forward(node_feat, coord, virtual_node_feat, virtual_coord,
                     data_batch, params, tile_nodes=512):
    f32, bf16 = jnp.float32, jnp.bfloat16
    N, H = node_feat.shape
    B, _, C = virtual_node_feat.shape

    # node tile: multiple of 16 (bf16 sublane packing safe); pad N up
    TN = max(16, ((int(tile_nodes) + 15) // 16) * 16)
    num_tiles = (N + TN - 1) // TN
    Np = num_tiles * TN
    pad = Np - N

    # ---- channel-major resident tables ----
    vnf_cbh = jnp.transpose(virtual_node_feat, (2, 0, 1)).astype(f32)     # [C, B, H]
    vcoord_cb3 = jnp.transpose(virtual_coord, (2, 0, 1)).astype(f32)      # [C, B, 3]

    # hoisted (exact, linear) first-layer projections
    proj_r = (node_feat.astype(f32) @ params['w1a']).astype(f32)          # [N, H]
    projv_b = (vnf_cbh @ params['w1b'] + params['b1']).astype(f32)        # [C, B, H]

    proj_r_p = jnp.pad(proj_r, ((0, pad), (0, 0)))                        # [Np, H]
    coord_p = jnp.pad(coord.astype(f32), ((0, pad), (0, 0)))              # [Np, 3]
    db_p = jnp.pad(data_batch.astype(jnp.int32), (0, pad),
                   constant_values=B).reshape(Np, 1)      # padded rows -> no graph

    counts = jnp.zeros((B,), f32).at[data_batch].add(1.0)
    inv = (1.0 / jnp.maximum(counts, 1.0)).reshape(B, 1)

    nt = num_tiles
    node_stream = lambda i, c: (i, 0)        # unchanged across inner channel axis
    const2 = lambda i, c: (0, 0)
    const3 = lambda i, c: (0, 0, 0)

    in_specs = [
        pl.BlockSpec((TN, H), node_stream),       # proj_r
        pl.BlockSpec((TN, 3), node_stream),       # coord
        pl.BlockSpec((TN, 1), node_stream),       # data_batch
        pl.BlockSpec((C, B, H), const3),          # projv_b (resident)
        pl.BlockSpec((C, B, H), const3),          # vnf (resident)
        pl.BlockSpec((C, B, 3), const3),          # vcoord (resident)
        pl.BlockSpec((B, 1), const2),             # 1/|graph|
        pl.BlockSpec((1, H), const2),             # w1c
        pl.BlockSpec((H, H), const2),             # w2 (bf16)
        pl.BlockSpec((1, H), const2),             # b2
        pl.BlockSpec((H, H), const2),             # wc1 (bf16)
        pl.BlockSpec((1, H), const2),             # bc1
        pl.BlockSpec((1, H), const2),             # wc2 row
        pl.BlockSpec((H, H), const2),             # wn1a
        pl.BlockSpec((H, H), const2),             # wn1b
        pl.BlockSpec((1, H), const2),             # bn1
        pl.BlockSpec((H, H), const2),             # wn2
        pl.BlockSpec((1, H), const2),             # bn2
    ]

    flops = int(4 * C * Np * H * H                       # w2, wc1 per-edge matmuls
                + 4 * C * Np * B * (H + 3)               # gathers + pooling
                + 6 * C * B * H * H                      # node_mlp
                + 12 * C * Np * H)                       # elementwise
    transcendentals = int(3 * C * Np * H + C * B * H)    # SiLU sigmoids
    bytes_accessed = int(Np * (4 * H + 12 + 4)           # node streams (fetched once)
                         + 5 * C * B * (H + 3) * 4       # residents + outputs
                         + 8 * H * H * 4)                # weights

    out_vnf_cbh, out_vcoord_cb3 = pl.pallas_call(
        _egcl_a2v_kernel,
        out_shape=(jax.ShapeDtypeStruct((C, B, H), f32),
                   jax.ShapeDtypeStruct((C, B, 3), f32)),
        grid=(nt, C),
        in_specs=in_specs,
        out_specs=(pl.BlockSpec((C, B, H), const3),
                   pl.BlockSpec((C, B, 3), const3)),
        scratch_shapes=[pltpu.VMEM((C, B, H), f32),
                        pltpu.VMEM((C, B, 3), f32)],
        compiler_params=pltpu.CompilerParams(
            # both axes feed the shared accumulators -> reduction semantics
            dimension_semantics=("arbitrary", "arbitrary"),
            vmem_limit_bytes=48 * 1024 * 1024,   # fits v7x (64 MiB) and v5e/v6e
        ),
        cost_estimate=pl.CostEstimate(flops=flops,
                                      transcendentals=transcendentals,
                                      bytes_accessed=bytes_accessed),
    )(proj_r_p, coord_p, db_p, projv_b, vnf_cbh, vcoord_cb3, inv,
      params['w1c'], params['w2'].astype(bf16), params['b2'],
      params['wc1'].astype(bf16), params['bc1'], params['wc2'].reshape(1, H),
      params['wn1a'], params['wn1b'], params['bn1'],
      params['wn2'], params['bn2'])

    # back to the PyTorch convention: [B, H, C] and [B, 3, C]
    new_vnf = jnp.transpose(out_vnf_cbh, (1, 2, 0))
    new_vcoord = jnp.transpose(out_vcoord_cb3, (1, 2, 0))
    return new_vnf, new_vcoord


# --------------------------------------------------------------------------
# Deterministic synthetic parameters (Linear default init; xavier*0.001 last)
# --------------------------------------------------------------------------
def init_params(key, H):
    ks = jax.random.split(key, 14)
    f32 = jnp.float32

    def lin(k, fan_in, shape):
        bound = 1.0 / (fan_in ** 0.5)
        return jax.random.uniform(k, shape, f32, -bound, bound)

    p = {}
    # edge_mlp: Linear(2H+1, H) split into (feat_R | feat_V | radial) parts
    p['w1a'] = lin(ks[0], 2 * H + 1, (H, H))
    p['w1b'] = lin(ks[1], 2 * H + 1, (H, H))
    p['w1c'] = lin(ks[2], 2 * H + 1, (1, H))
    p['b1'] = lin(ks[3], 2 * H + 1, (1, H))
    p['w2'] = lin(ks[4], H, (H, H))
    p['b2'] = lin(ks[5], H, (1, H))
    # coord_mlp
    p['wc1'] = lin(ks[6], H, (H, H))
    p['bc1'] = lin(ks[7], H, (1, H))
    xb = 0.001 * (6.0 / (H + 1)) ** 0.5
    p['wc2'] = jax.random.uniform(ks[8], (H, 1), f32, -xb, xb)  # no bias
    # node_mlp: Linear(2H, H) split into (virtual_node_feat | agg) parts
    p['wn1a'] = lin(ks[9], 2 * H, (H, H))
    p['wn1b'] = lin(ks[10], 2 * H, (H, H))
    p['bn1'] = lin(ks[11], 2 * H, (1, H))
    p['wn2'] = lin(ks[12], H, (H, H))
    p['bn2'] = lin(ks[13], H, (1, H))
    return p


# --------------------------------------------------------------------------
# Pure-JAX reference (mirrors PyTorch module semantics exactly)
# --------------------------------------------------------------------------
def reference_forward(node_feat, coord, virtual_node_feat, virtual_coord,
                      data_batch, p):
    B, H, C = virtual_node_feat.shape
    silu = jax.nn.silu
    perm = lambda x: jnp.transpose(x, (0, 2, 1))

    diff = virtual_coord[data_batch] - coord[..., None]            # [N, 3, C]
    radial = jnp.linalg.norm(diff, axis=1, keepdims=True)          # [N, 1, C]

    feat_R = jnp.broadcast_to(node_feat[..., None], node_feat.shape + (C,))  # [N,H,C]
    feat_V = virtual_node_feat[data_batch]                         # [N, H, C]

    x_r, x_v, x_rad = perm(feat_R), perm(feat_V), perm(radial)     # [N,C,*]
    h = silu(x_r @ p['w1a'] + x_v @ p['w1b'] + x_rad * p['w1c'] + p['b1'])
    edge = silu(h @ p['w2'] + p['b2'])                             # [N, C, H]

    c1 = silu(edge @ p['wc1'] + p['bc1'])
    c2 = c1 @ p['wc2']                                             # [N, C, 1]
    trans = perm(diff) * c2                                        # [N, C, 3]

    onehot = (data_batch[None, :] == jnp.arange(B)[:, None]).astype(jnp.float32)
    P = onehot / jnp.maximum(onehot.sum(axis=1, keepdims=True), 1.0)
    coord_agg = jnp.einsum('bn,ncd->bcd', P, trans)                # [B, C, 3]
    new_vcoord = virtual_coord + perm(coord_agg)                   # [B, 3, C]

    edge_agg = jnp.einsum('bn,nch->bch', P, edge)                  # [B, C, H]
    vnf_p = perm(virtual_node_feat)                                # [B, C, H]
    n1 = silu(vnf_p @ p['wn1a'] + edge_agg @ p['wn1b'] + p['bn1'])
    n2 = n1 @ p['wn2'] + p['bn2']
    new_vnf = virtual_node_feat + perm(n2)                         # [B, H, C]
    return new_vnf, new_vcoord


if __name__ == "__main__":
    key = jax.random.PRNGKey(0)
    N, B, C, H = 32, 2, 4, 32   # nodes, graphs, virtual_channels, hidden_nf
    k1, k2, k3, k4, kp = jax.random.split(key, 5)

    node_feat = jax.random.normal(k1, (N, H), jnp.float32)
    coord = jax.random.normal(k2, (N, 3), jnp.float32)
    virtual_node_feat = jax.random.normal(k3, (B, H, C), jnp.float32)
    virtual_coord = jax.random.normal(k4, (B, 3, C), jnp.float32)
    data_batch = jnp.concatenate([jnp.zeros((20,), jnp.int32),
                                  jnp.ones((12,), jnp.int32)])

    params = init_params(kp, H)

    # small tile so the test exercises multi-tile accumulation (grid = (2, 4))
    out_vnf, out_vcoord = egcl_a2v_forward(
        node_feat, coord, virtual_node_feat, virtual_coord, data_batch, params,
        tile_nodes=16)
    jax.block_until_ready((out_vnf, out_vcoord))

    ref_vnf, ref_vcoord = reference_forward(
        node_feat, coord, virtual_node_feat, virtual_coord, data_batch, params)

    assert out_vnf.shape == (B, H, C) and out_vcoord.shape == (B, 3, C)
    err = max(float(jnp.max(jnp.abs(out_vnf - ref_vnf))),
              float(jnp.max(jnp.abs(out_vcoord - ref_vcoord))))
    # bf16 MXU operands with f32 accumulation -> allow up to 1e-2 absolute error
    assert err < 1e-2, f"mismatch vs reference: max abs err = {err}"

    print("KERNEL_OK")
</pallas_src>

<mosaic_0001>
module attributes {stable_mosaic.version = 11 : i64} {
  func.func @_egcl_a2v_kernel(%arg0: i32, %arg1: i32, %arg2: memref<16x32xf32, #tpu.memory_space<vmem>>, %arg3: memref<16x3xf32, #tpu.memory_space<vmem>>, %arg4: memref<16x1xi32, #tpu.memory_space<vmem>>, %arg5: memref<4x2x32xf32, #tpu.memory_space<vmem>>, %arg6: memref<4x2x32xf32, #tpu.memory_space<vmem>>, %arg7: memref<4x2x3xf32, #tpu.memory_space<vmem>>, %arg8: memref<2x1xf32, #tpu.memory_space<vmem>>, %arg9: memref<1x32xf32, #tpu.memory_space<vmem>>, %arg10: memref<32x32xbf16, #tpu.memory_space<vmem>>, %arg11: memref<1x32xf32, #tpu.memory_space<vmem>>, %arg12: memref<32x32xbf16, #tpu.memory_space<vmem>>, %arg13: memref<1x32xf32, #tpu.memory_space<vmem>>, %arg14: memref<1x32xf32, #tpu.memory_space<vmem>>, %arg15: memref<32x32xf32, #tpu.memory_space<vmem>>, %arg16: memref<32x32xf32, #tpu.memory_space<vmem>>, %arg17: memref<1x32xf32, #tpu.memory_space<vmem>>, %arg18: memref<32x32xf32, #tpu.memory_space<vmem>>, %arg19: memref<1x32xf32, #tpu.memory_space<vmem>>, %arg20: memref<4x2x32xf32, #tpu.memory_space<vmem>>, %arg21: memref<4x2x3xf32, #tpu.memory_space<vmem>>, %arg22: memref<4x2x32xf32, #tpu.memory_space<vmem>>, %arg23: memref<4x2x3xf32, #tpu.memory_space<vmem>>) attributes {dimension_semantics = [#tpu.dimension_semantics<arbitrary>, #tpu.dimension_semantics<arbitrary>], iteration_bounds = array<i64: 2, 4>, scalar_prefetch = 0 : i64, scratch_operands = 2 : i64, tpu.core_type = #tpu.core_type<tc>, window_params = [{transform_indices = @transform_0, window_bounds = array<i64: 16, 32>}, {transform_indices = @transform_1, window_bounds = array<i64: 16, 3>}, {transform_indices = @transform_2, window_bounds = array<i64: 16, 1>}, {pipeline_mode = #tpu.pipeline_mode<synchronous>, transform_indices = @transform_3, window_bounds = array<i64: 4, 2, 32>}, {pipeline_mode = #tpu.pipeline_mode<synchronous>, transform_indices = @transform_4, window_bounds = array<i64: 4, 2, 32>}, {pipeline_mode = #tpu.pipeline_mode<synchronous>, transform_indices = @transform_5, window_bounds = array<i64: 4, 2, 3>}, {pipeline_mode = #tpu.pipeline_mode<synchronous>, transform_indices = @transform_6, window_bounds = array<i64: 2, 1>}, {pipeline_mode = #tpu.pipeline_mode<synchronous>, transform_indices = @transform_7, window_bounds = array<i64: 1, 32>}, {pipeline_mode = #tpu.pipeline_mode<synchronous>, transform_indices = @transform_8, window_bounds = array<i64: 32, 32>}, {pipeline_mode = #tpu.pipeline_mode<synchronous>, transform_indices = @transform_9, window_bounds = array<i64: 1, 32>}, {pipeline_mode = #tpu.pipeline_mode<synchronous>, transform_indices = @transform_10, window_bounds = array<i64: 32, 32>}, {pipeline_mode = #tpu.pipeline_mode<synchronous>, transform_indices = @transform_11, window_bounds = array<i64: 1, 32>}, {pipeline_mode = #tpu.pipeline_mode<synchronous>, transform_indices = @transform_12, window_bounds = array<i64: 1, 32>}, {pipeline_mode = #tpu.pipeline_mode<synchronous>, transform_indices = @transform_13, window_bounds = array<i64: 32, 32>}, {pipeline_mode = #tpu.pipeline_mode<synchronous>, transform_indices = @transform_14, window_bounds = array<i64: 32, 32>}, {pipeline_mode = #tpu.pipeline_mode<synchronous>, transform_indices = @transform_15, window_bounds = array<i64: 1, 32>}, {pipeline_mode = #tpu.pipeline_mode<synchronous>, transform_indices = @transform_16, window_bounds = array<i64: 32, 32>}, {pipeline_mode = #tpu.pipeline_mode<synchronous>, transform_indices = @transform_17, window_bounds = array<i64: 1, 32>}, {pipeline_mode = #tpu.pipeline_mode<synchronous>, transform_indices = @transform_18, window_bounds = array<i64: 4, 2, 32>}, {pipeline_mode = #tpu.pipeline_mode<synchronous>, transform_indices = @transform_19, window_bounds = array<i64: 4, 2, 3>}]} {
    %c1_i32 = arith.constant 1 : i32
    %0 = arith.cmpi eq, %arg0, %c1_i32 : i32
    %c3_i32 = arith.constant 3 : i32
    %1 = arith.cmpi eq, %arg1, %c3_i32 : i32
    %2 = arith.andi %0, %1 : i1
    %c0_i32 = arith.constant 0 : i32
    %3 = arith.cmpi eq, %arg0, %c0_i32 : i32
    %c0_i32_0 = arith.constant 0 : i32
    %4 = arith.cmpi eq, %arg1, %c0_i32_0 : i32
    %5 = arith.andi %3, %4 : i1
    %6 = arith.extui %5 : i1 to i32
    %c0_i32_1 = arith.constant 0 : i32
    %7 = arith.cmpi ne, %6, %c0_i32_1 : i32
    scf.if %7 {
      %cst_42 = arith.constant 0.000000e+00 : f32
      %92 = vector.broadcast %cst_42 : f32 to vector<4x2x32xf32>
      %c0_43 = arith.constant 0 : index
      %c0_44 = arith.constant 0 : index
      %c0_45 = arith.constant 0 : index
      %93 = vector.load %arg22[%c0_43, %c0_44, %c0_45] : memref<4x2x32xf32, #tpu.memory_space<vmem>>, vector<4x2x32xf32>
      tpu.vector_store %arg22[%c0_43, %c0_44, %c0_45], %92 {strides = array<i32>} : memref<4x2x32xf32, #tpu.memory_space<vmem>>, vector<4x2x32xf32>,
      %cst_46 = arith.constant 0.000000e+00 : f32
      %94 = vector.broadcast %cst_46 : f32 to vector<4x2x3xf32>
      %c0_47 = arith.constant 0 : index
      %c0_48 = arith.constant 0 : index
      %c0_49 = arith.constant 0 : index
      %95 = vector.load %arg23[%c0_47, %c0_48, %c0_49] : memref<4x2x3xf32, #tpu.memory_space<vmem>>, vector<4x2x3xf32>
      tpu.vector_store %arg23[%c0_47, %c0_48, %c0_49], %94 {strides = array<i32>} : memref<4x2x3xf32, #tpu.memory_space<vmem>>, vector<4x2x3xf32>,
    } else {
    }
    %c0 = arith.constant 0 : index
    %c0_2 = arith.constant 0 : index
    %8 = vector.load %arg4[%c0, %c0_2] : memref<16x1xi32, #tpu.memory_space<vmem>>, vector<16x1xi32>
    %9 = tpu.iota {dimensions = array<i32: 1>} : vector<16x2xi32>
    %10 = vector.broadcast %8 : vector<16x1xi32> to vector<16x2xi32>
    %11 = arith.cmpi eq, %10, %9 : vector<16x2xi32>
    %12 = arith.extui %11 : vector<16x2xi1> to vector<16x2xi32>
    %13 = arith.sitofp %12 : vector<16x2xi32> to vector<16x2xf32>
    %14 = arith.index_cast %arg1 : i32 to index
    %c0_3 = arith.constant 0 : index
    %c0_4 = arith.constant 0 : index
    %15 = vector.load %arg5[%14, %c0_3, %c0_4] : memref<4x2x32xf32, #tpu.memory_space<vmem>>, vector<1x2x32xf32>
    %16 = vector.shape_cast %15 : vector<1x2x32xf32> to vector<2x32xf32>
    %17 = arith.index_cast %arg1 : i32 to index
    %c0_5 = arith.constant 0 : index
    %c0_6 = arith.constant 0 : index
    %18 = vector.load %arg7[%17, %c0_5, %c0_6] : memref<4x2x3xf32, #tpu.memory_space<vmem>>, vector<1x2x3xf32>
    %19 = vector.shape_cast %18 : vector<1x2x3xf32> to vector<2x3xf32>
    %cst = arith.constant dense<0.000000e+00> : vector<16x32xf32>
    %20 = tpu.matmul %13, %16, %cst {dimension_numbers = #tpu.dot_dimension_numbers<[1], [0], [0], [1], [0, 0, 1, 1], [], []>} : vector<16x2xf32>, vector<2x32xf32>, vector<16x32xf32> -> vector<16x32xf32>
    %cst_7 = arith.constant dense<0.000000e+00> : vector<16x3xf32>
    %21 = tpu.matmul %13, %19, %cst_7 {dimension_numbers = #tpu.dot_dimension_numbers<[1], [0], [0], [1], [0, 0, 1, 1], [], []>} : vector<16x2xf32>, vector<2x3xf32>, vector<16x3xf32> -> vector<16x3xf32>
    %c0_8 = arith.constant 0 : index
    %c0_9 = arith.constant 0 : index
    %22 = vector.load %arg3[%c0_8, %c0_9] : memref<16x3xf32, #tpu.memory_space<vmem>>, vector<16x3xf32>
    %23 = arith.subf %21, %22 : vector<16x3xf32>
    %24 = arith.mulf %23, %23 : vector<16x3xf32>
    %cst_10 = arith.constant dense<0.000000e+00> : vector<16xf32>
    %25 = vector.multi_reduction <add>, %24, %cst_10 [1] : vector<16x3xf32> to vector<16xf32>
    %26 = vector.shape_cast %25 : vector<16xf32> to vector<16x1xf32>
    %27 = math.sqrt %26 : vector<16x1xf32>
    %c0_11 = arith.constant 0 : index
    %c0_12 = arith.constant 0 : index
    %28 = vector.load %arg2[%c0_11, %c0_12] : memref<16x32xf32, #tpu.memory_space<vmem>>, vector<16x32xf32>
    %29 = arith.addf %28, %20 : vector<16x32xf32>
    %c0_13 = arith.constant 0 : index
    %c0_14 = arith.constant 0 : index
    %30 = vector.load %arg9[%c0_13, %c0_14] : memref<1x32xf32, #tpu.memory_space<vmem>>, vector<1x32xf32>
    %31 = vector.broadcast %27 : vector<16x1xf32> to vector<16x32xf32>
    %32 = vector.broadcast %30 : vector<1x32xf32> to vector<16x32xf32>
    %33 = arith.mulf %31, %32 : vector<16x32xf32>
    %34 = arith.addf %29, %33 : vector<16x32xf32>
    %35 = arith.negf %34 : vector<16x32xf32>
    %36 = math.exp %35 : vector<16x32xf32>
    %cst_15 = arith.constant 1.000000e+00 : f32
    %37 = vector.broadcast %cst_15 : f32 to vector<16x32xf32>
    %38 = arith.addf %37, %36 : vector<16x32xf32>
    %39 = arith.divf %37, %38 : vector<16x32xf32>
    %40 = arith.mulf %34, %39 : vector<16x32xf32>
    %41 = arith.truncf %40 : vector<16x32xf32> to vector<16x32xbf16>
    %c0_16 = arith.constant 0 : index
    %c0_17 = arith.constant 0 : index
    %42 = vector.load %arg10[%c0_16, %c0_17] : memref<32x32xbf16, #tpu.memory_space<vmem>>, vector<32x32xbf16>
    %cst_18 = arith.constant dense<0.000000e+00> : vector<16x32xf32>
    %43 = tpu.matmul %41, %42, %cst_18 {dimension_numbers = #tpu.dot_dimension_numbers<[1], [0], [0], [1], [0, 0, 1, 1], [], []>} : vector<16x32xbf16>, vector<32x32xbf16>, vector<16x32xf32> -> vector<16x32xf32>
    %c0_19 = arith.constant 0 : index
    %c0_20 = arith.constant 0 : index
    %44 = vector.load %arg11[%c0_19, %c0_20] : memref<1x32xf32, #tpu.memory_space<vmem>>, vector<1x32xf32>
    %45 = vector.broadcast %44 : vector<1x32xf32> to vector<16x32xf32>
    %46 = arith.addf %43, %45 : vector<16x32xf32>
    %47 = arith.negf %46 : vector<16x32xf32>
    %48 = math.exp %47 : vector<16x32xf32>
    %cst_21 = arith.constant 1.000000e+00 : f32
    %49 = vector.broadcast %cst_21 : f32 to vector<16x32xf32>
    %50 = arith.addf %49, %48 : vector<16x32xf32>
    %51 = arith.divf %49, %50 : vector<16x32xf32>
    %52 = arith.mulf %46, %51 : vector<16x32xf32>
    %53 = arith.truncf %52 : vector<16x32xf32> to vector<16x32xbf16>
    %c0_22 = arith.constant 0 : index
    %c0_23 = arith.constant 0 : index
    %54 = vector.load %arg12[%c0_22, %c0_23] : memref<32x32xbf16, #tpu.memory_space<vmem>>, vector<32x32xbf16>
    %cst_24 = arith.constant dense<0.000000e+00> : vector<16x32xf32>
    %55 = tpu.matmul %53, %54, %cst_24 {dimension_numbers = #tpu.dot_dimension_numbers<[1], [0], [0], [1], [0, 0, 1, 1], [], []>} : vector<16x32xbf16>, vector<32x32xbf16>, vector<16x32xf32> -> vector<16x32xf32>
    %c0_25 = arith.constant 0 : index
    %c0_26 = arith.constant 0 : index
    %56 = vector.load %arg13[%c0_25, %c0_26] : memref<1x32xf32, #tpu.memory_space<vmem>>, vector<1x32xf32>
    %57 = vector.broadcast %56 : vector<1x32xf32> to vector<16x32xf32>
    %58 = arith.addf %55, %57 : vector<16x32xf32>
    %59 = arith.negf %58 : vector<16x32xf32>
    %60 = math.exp %59 : vector<16x32xf32>
    %cst_27 = arith.constant 1.000000e+00 : f32
    %61 = vector.broadcast %cst_27 : f32 to vector<16x32xf32>
    %62 = arith.addf %61, %60 : vector<16x32xf32>
    %63 = arith.divf %61, %62 : vector<16x32xf32>
    %64 = arith.mulf %58, %63 : vector<16x32xf32>
    %c0_28 = arith.constant 0 : index
    %c0_29 = arith.constant 0 : index
    %65 = vector.load %arg14[%c0_28, %c0_29] : memref<1x32xf32, #tpu.memory_space<vmem>>, vector<1x32xf32>
    %66 = vector.broadcast %65 : vector<1x32xf32> to vector<16x32xf32>
    %67 = arith.mulf %64, %66 : vector<16x32xf32>
    %cst_30 = arith.constant dense<0.000000e+00> : vector<16xf32>
    %68 = vector.multi_reduction <add>, %67, %cst_30 [1] : vector<16x32xf32> to vector<16xf32>
    %69 = vector.shape_cast %68 : vector<16xf32> to vector<16x1xf32>
    %70 = vector.broadcast %69 : vector<16x1xf32> to vector<16x3xf32>
    %71 = arith.mulf %23, %70 : vector<16x3xf32>
    %72 = arith.index_cast %arg1 : i32 to index
    %c0_31 = arith.constant 0 : index
    %c0_32 = arith.constant 0 : index
    %73 = vector.load %arg22[%72, %c0_31, %c0_32] : memref<4x2x32xf32, #tpu.memory_space<vmem>>, vector<1x2x32xf32>
    %74 = vector.shape_cast %73 : vector<1x2x32xf32> to vector<2x32xf32>
    %cst_33 = arith.constant dense<0.000000e+00> : vector<2x32xf32>
    %75 = tpu.matmul %13, %52, %cst_33 {dimension_numbers = #tpu.dot_dimension_numbers<[0], [0], [1], [1], [0, 1, 1, 1], [], []>} : vector<16x2xf32>, vector<16x32xf32>, vector<2x32xf32> -> vector<2x32xf32>
    %76 = arith.addf %74, %75 : vector<2x32xf32>
    %77 = arith.index_cast %arg1 : i32 to index
    %c0_34 = arith.constant 0 : index
    %c0_35 = arith.constant 0 : index
    %78 = vector.load %arg22[%77, %c0_34, %c0_35] : memref<4x2x32xf32, #tpu.memory_space<vmem>>, vector<1x2x32xf32>
    %79 = vector.shape_cast %78 : vector<1x2x32xf32> to vector<2x32xf32>
    %80 = vector.shape_cast %76 : vector<2x32xf32> to vector<1x2x32xf32>
    tpu.vector_store %arg22[%77, %c0_34, %c0_35], %80 {strides = array<i32>} : memref<4x2x32xf32, #tpu.memory_space<vmem>>, vector<1x2x32xf32>,
    %81 = arith.index_cast %arg1 : i32 to index
    %c0_36 = arith.constant 0 : index
    %c0_37 = arith.constant 0 : index
    %82 = vector.load %arg23[%81, %c0_36, %c0_37] : memref<4x2x3xf32, #tpu.memory_space<vmem>>, vector<1x2x3xf32>
    %83 = vector.shape_cast %82 : vector<1x2x3xf32> to vector<2x3xf32>
    %cst_38 = arith.constant dense<0.000000e+00> : vector<2x3xf32>
    %84 = tpu.matmul %13, %71, %cst_38 {dimension_numbers = #tpu.dot_dimension_numbers<[0], [0], [1], [1], [0, 1, 1, 1], [], []>} : vector<16x2xf32>, vector<16x3xf32>, vector<2x3xf32> -> vector<2x3xf32>
    %85 = arith.addf %83, %84 : vector<2x3xf32>
    %86 = arith.index_cast %arg1 : i32 to index
    %c0_39 = arith.constant 0 : index
    %c0_40 = arith.constant 0 : index
    %87 = vector.load %arg23[%86, %c0_39, %c0_40] : memref<4x2x3xf32, #tpu.memory_space<vmem>>, vector<1x2x3xf32>
    %88 = vector.shape_cast %87 : vector<1x2x3xf32> to vector<2x3xf32>
    %89 = vector.shape_cast %85 : vector<2x3xf32> to vector<1x2x3xf32>
    tpu.vector_store %arg23[%86, %c0_39, %c0_40], %89 {strides = array<i32>} : memref<4x2x3xf32, #tpu.memory_space<vmem>>, vector<1x2x3xf32>,
    %90 = arith.extui %2 : i1 to i32
    %c0_i32_41 = arith.constant 0 : i32
    %91 = arith.cmpi ne, %90, %c0_i32_41 : i32
    scf.if %91 {
      %c0_42 = arith.constant 0 : index
      %c0_43 = arith.constant 0 : index
      %92 = vector.load %arg8[%c0_42, %c0_43] : memref<2x1xf32, #tpu.memory_space<vmem>>, vector<2x1xf32>
      %c0_44 = arith.constant 0 : index
      %c0_45 = arith.constant 0 : index
      %c0_46 = arith.constant 0 : index
      %93 = vector.load %arg22[%c0_44, %c0_45, %c0_46] : memref<4x2x32xf32, #tpu.memory_space<vmem>>, vector<1x2x32xf32>
      %94 = vector.shape_cast %93 : vector<1x2x32xf32> to vector<2x32xf32>
      %95 = vector.broadcast %92 : vector<2x1xf32> to vector<2x32xf32>
      %96 = arith.mulf %94, %95 : vector<2x32xf32>
      %c0_47 = arith.constant 0 : index
      %c0_48 = arith.constant 0 : index
      %c0_49 = arith.constant 0 : index
      %97 = vector.load %arg7[%c0_47, %c0_48, %c0_49] : memref<4x2x3xf32, #tpu.memory_space<vmem>>, vector<1x2x3xf32>
      %98 = vector.shape_cast %97 : vector<1x2x3xf32> to vector<2x3xf32>
      %c0_50 = arith.constant 0 : index
      %c0_51 = arith.constant 0 : index
      %c0_52 = arith.constant 0 : index
      %99 = vector.load %arg23[%c0_50, %c0_51, %c0_52] : memref<4x2x3xf32, #tpu.memory_space<vmem>>, vector<1x2x3xf32>
      %100 = vector.shape_cast %99 : vector<1x2x3xf32> to vector<2x3xf32>
      %101 = vector.broadcast %92 : vector<2x1xf32> to vector<2x3xf32>
      %102 = arith.mulf %100, %101 : vector<2x3xf32>
      %103 = arith.addf %98, %102 : vector<2x3xf32>
      %c0_53 = arith.constant 0 : index
      %c0_54 = arith.constant 0 : index
      %c0_55 = arith.constant 0 : index
      %104 = vector.load %arg21[%c0_53, %c0_54, %c0_55] : memref<4x2x3xf32, #tpu.memory_space<vmem>>, vector<1x2x3xf32>
      %105 = vector.shape_cast %104 : vector<1x2x3xf32> to vector<2x3xf32>
      %106 = vector.shape_cast %103 : vector<2x3xf32> to vector<1x2x3xf32>
      tpu.vector_store %arg21[%c0_53, %c0_54, %c0_55], %106 {strides = array<i32>} : memref<4x2x3xf32, #tpu.memory_space<vmem>>, vector<1x2x3xf32>,
      %c0_56 = arith.constant 0 : index
      %c0_57 = arith.constant 0 : index
      %c0_58 = arith.constant 0 : index
      %107 = vector.load %arg6[%c0_56, %c0_57, %c0_58] : memref<4x2x32xf32, #tpu.memory_space<vmem>>, vector<1x2x32xf32>
      %108 = vector.shape_cast %107 : vector<1x2x32xf32> to vector<2x32xf32>
      %c0_59 = arith.constant 0 : index
      %c0_60 = arith.constant 0 : index
      %109 = vector.load %arg15[%c0_59, %c0_60] : memref<32x32xf32, #tpu.memory_space<vmem>>, vector<32x32xf32>
      %cst_61 = arith.constant dense<0.000000e+00> : vector<2x32xf32>
      %110 = tpu.matmul %108, %109, %cst_61 {dimension_numbers = #tpu.dot_dimension_numbers<[1], [0], [0], [1], [0, 0, 1, 1], [], []>} : vector<2x32xf32>, vector<32x32xf32>, vector<2x32xf32> -> vector<2x32xf32>
      %c0_62 = arith.constant 0 : index
      %c0_63 = arith.constant 0 : index
      %111 = vector.load %arg16[%c0_62, %c0_63] : memref<32x32xf32, #tpu.memory_space<vmem>>, vector<32x32xf32>
      %cst_64 = arith.constant dense<0.000000e+00> : vector<2x32xf32>
      %112 = tpu.matmul %96, %111, %cst_64 {dimension_numbers = #tpu.dot_dimension_numbers<[1], [0], [0], [1], [0, 0, 1, 1], [], []>} : vector<2x32xf32>, vector<32x32xf32>, vector<2x32xf32> -> vector<2x32xf32>
      %113 = arith.addf %110, %112 : vector<2x32xf32>
      %c0_65 = arith.constant 0 : index
      %c0_66 = arith.constant 0 : index
      %114 = vector.load %arg17[%c0_65, %c0_66] : memref<1x32xf32, #tpu.memory_space<vmem>>, vector<1x32xf32>
      %115 = vector.broadcast %114 : vector<1x32xf32> to vector<2x32xf32>
      %116 = arith.addf %113, %115 : vector<2x32xf32>
      %117 = arith.negf %116 : vector<2x32xf32>
      %118 = math.exp %117 : vector<2x32xf32>
      %cst_67 = arith.constant 1.000000e+00 : f32
      %119 = vector.broadcast %cst_67 : f32 to vector<2x32xf32>
      %120 = arith.addf %119, %118 : vector<2x32xf32>
      %121 = arith.divf %119, %120 : vector<2x32xf32>
      %122 = arith.mulf %116, %121 : vector<2x32xf32>
      %c0_68 = arith.constant 0 : index
      %c0_69 = arith.constant 0 : index
      %123 = vector.load %arg18[%c0_68, %c0_69] : memref<32x32xf32, #tpu.memory_space<vmem>>, vector<32x32xf32>
      %cst_70 = arith.constant dense<0.000000e+00> : vector<2x32xf32>
      %124 = tpu.matmul %122, %123, %cst_70 {dimension_numbers = #tpu.dot_dimension_numbers<[1], [0], [0], [1], [0, 0, 1, 1], [], []>} : vector<2x32xf32>, vector<32x32xf32>, vector<2x32xf32> -> vector<2x32xf32>
      %c0_71 = arith.constant 0 : index
      %c0_72 = arith.constant 0 : index
      %125 = vector.load %arg19[%c0_71, %c0_72] : memref<1x32xf32, #tpu.memory_space<vmem>>, vector<1x32xf32>
      %126 = vector.broadcast %125 : vector<1x32xf32> to vector<2x32xf32>
      %127 = arith.addf %124, %126 : vector<2x32xf32>
      %128 = arith.addf %108, %127 : vector<2x32xf32>
      %c0_73 = arith.constant 0 : index
      %c0_74 = arith.constant 0 : index
      %c0_75 = arith.constant 0 : index
      %129 = vector.load %arg20[%c0_73, %c0_74, %c0_75] : memref<4x2x32xf32, #tpu.memory_space<vmem>>, vector<1x2x32xf32>
      %130 = vector.shape_cast %129 : vector<1x2x32xf32> to vector<2x32xf32>
      %131 = vector.shape_cast %128 : vector<2x32xf32> to vector<1x2x32xf32>
      tpu.vector_store %arg20[%c0_73, %c0_74, %c0_75], %131 {strides = array<i32>} : memref<4x2x32xf32, #tpu.memory_space<vmem>>, vector<1x2x32xf32>,
      %c1 = arith.constant 1 : index
      %c0_76 = arith.constant 0 : index
      %c0_77 = arith.constant 0 : index
      %132 = vector.load %arg22[%c1, %c0_76, %c0_77] : memref<4x2x32xf32, #tpu.memory_space<vmem>>, vector<1x2x32xf32>
      %133 = vector.shape_cast %132 : vector<1x2x32xf32> to vector<2x32xf32>
      %134 = vector.broadcast %92 : vector<2x1xf32> to vector<2x32xf32>
      %135 = arith.mulf %133, %134 : vector<2x32xf32>
      %c1_78 = arith.constant 1 : index
      %c0_79 = arith.constant 0 : index
      %c0_80 = arith.constant 0 : index
      %136 = vector.load %arg7[%c1_78, %c0_79, %c0_80] : memref<4x2x3xf32, #tpu.memory_space<vmem>>, vector<1x2x3xf32>
      %137 = vector.shape_cast %136 : vector<1x2x3xf32> to vector<2x3xf32>
      %c1_81 = arith.constant 1 : index
      %c0_82 = arith.constant 0 : index
      %c0_83 = arith.constant 0 : index
      %138 = vector.load %arg23[%c1_81, %c0_82, %c0_83] : memref<4x2x3xf32, #tpu.memory_space<vmem>>, vector<1x2x3xf32>
      %139 = vector.shape_cast %138 : vector<1x2x3xf32> to vector<2x3xf32>
      %140 = vector.broadcast %92 : vector<2x1xf32> to vector<2x3xf32>
      %141 = arith.mulf %139, %140 : vector<2x3xf32>
      %142 = arith.addf %137, %141 : vector<2x3xf32>
      %c1_84 = arith.constant 1 : index
      %c0_85 = arith.constant 0 : index
      %c0_86 = arith.constant 0 : index
      %143 = vector.load %arg21[%c1_84, %c0_85, %c0_86] : memref<4x2x3xf32, #tpu.memory_space<vmem>>, vector<1x2x3xf32>
      %144 = vector.shape_cast %143 : vector<1x2x3xf32> to vector<2x3xf32>
      %145 = vector.shape_cast %142 : vector<2x3xf32> to vector<1x2x3xf32>
      tpu.vector_store %arg21[%c1_84, %c0_85, %c0_86], %145 {strides = array<i32>} : memref<4x2x3xf32, #tpu.memory_space<vmem>>, vector<1x2x3xf32>,
      %c1_87 = arith.constant 1 : index
      %c0_88 = arith.constant 0 : index
      %c0_89 = arith.constant 0 : index
      %146 = vector.load %arg6[%c1_87, %c0_88, %c0_89] : memref<4x2x32xf32, #tpu.memory_space<vmem>>, vector<1x2x32xf32>
      %147 = vector.shape_cast %146 : vector<1x2x32xf32> to vector<2x32xf32>
      %c0_90 = arith.constant 0 : index
      %c0_91 = arith.constant 0 : index
      %148 = vector.load %arg15[%c0_90, %c0_91] : memref<32x32xf32, #tpu.memory_space<vmem>>, vector<32x32xf32>
      %cst_92 = arith.constant dense<0.000000e+00> : vector<2x32xf32>
      %149 = tpu.matmul %147, %148, %cst_92 {dimension_numbers = #tpu.dot_dimension_numbers<[1], [0], [0], [1], [0, 0, 1, 1], [], []>} : vector<2x32xf32>, vector<32x32xf32>, vector<2x32xf32> -> vector<2x32xf32>
      %c0_93 = arith.constant 0 : index
      %c0_94 = arith.constant 0 : index
      %150 = vector.load %arg16[%c0_93, %c0_94] : memref<32x32xf32, #tpu.memory_space<vmem>>, vector<32x32xf32>
      %cst_95 = arith.constant dense<0.000000e+00> : vector<2x32xf32>
      %151 = tpu.matmul %135, %150, %cst_95 {dimension_numbers = #tpu.dot_dimension_numbers<[1], [0], [0], [1], [0, 0, 1, 1], [], []>} : vector<2x32xf32>, vector<32x32xf32>, vector<2x32xf32> -> vector<2x32xf32>
      %152 = arith.addf %149, %151 : vector<2x32xf32>
      %c0_96 = arith.constant 0 : index
      %c0_97 = arith.constant 0 : index
      %153 = vector.load %arg17[%c0_96, %c0_97] : memref<1x32xf32, #tpu.memory_space<vmem>>, vector<1x32xf32>
      %154 = vector.broadcast %153 : vector<1x32xf32> to vector<2x32xf32>
      %155 = arith.addf %152, %154 : vector<2x32xf32>
      %156 = arith.negf %155 : vector<2x32xf32>
      %157 = math.exp %156 : vector<2x32xf32>
      %cst_98 = arith.constant 1.000000e+00 : f32
      %158 = vector.broadcast %cst_98 : f32 to vector<2x32xf32>
      %159 = arith.addf %158, %157 : vector<2x32xf32>
      %160 = arith.divf %158, %159 : vector<2x32xf32>
      %161 = arith.mulf %155, %160 : vector<2x32xf32>
      %c0_99 = arith.constant 0 : index
      %c0_100 = arith.constant 0 : index
      %162 = vector.load %arg18[%c0_99, %c0_100] : memref<32x32xf32, #tpu.memory_space<vmem>>, vector<32x32xf32>
      %cst_101 = arith.constant dense<0.000000e+00> : vector<2x32xf32>
      %163 = tpu.matmul %161, %162, %cst_101 {dimension_numbers = #tpu.dot_dimension_numbers<[1], [0], [0], [1], [0, 0, 1, 1], [], []>} : vector<2x32xf32>, vector<32x32xf32>, vector<2x32xf32> -> vector<2x32xf32>
      %c0_102 = arith.constant 0 : index
      %c0_103 = arith.constant 0 : index
      %164 = vector.load %arg19[%c0_102, %c0_103] : memref<1x32xf32, #tpu.memory_space<vmem>>, vector<1x32xf32>
      %165 = vector.broadcast %164 : vector<1x32xf32> to vector<2x32xf32>
      %166 = arith.addf %163, %165 : vector<2x32xf32>
      %167 = arith.addf %147, %166 : vector<2x32xf32>
      %c1_104 = arith.constant 1 : index
      %c0_105 = arith.constant 0 : index
      %c0_106 = arith.constant 0 : index
      %168 = vector.load %arg20[%c1_104, %c0_105, %c0_106] : memref<4x2x32xf32, #tpu.memory_space<vmem>>, vector<1x2x32xf32>
      %169 = vector.shape_cast %168 : vector<1x2x32xf32> to vector<2x32xf32>
      %170 = vector.shape_cast %167 : vector<2x32xf32> to vector<1x2x32xf32>
      tpu.vector_store %arg20[%c1_104, %c0_105, %c0_106], %170 {strides = array<i32>} : memref<4x2x32xf32, #tpu.memory_space<vmem>>, vector<1x2x32xf32>,
      %c2 = arith.constant 2 : index
      %c0_107 = arith.constant 0 : index
      %c0_108 = arith.constant 0 : index
      %171 = vector.load %arg22[%c2, %c0_107, %c0_108] : memref<4x2x32xf32, #tpu.memory_space<vmem>>, vector<1x2x32xf32>
      %172 = vector.shape_cast %171 : vector<1x2x32xf32> to vector<2x32xf32>
      %173 = vector.broadcast %92 : vector<2x1xf32> to vector<2x32xf32>
      %174 = arith.mulf %172, %173 : vector<2x32xf32>
      %c2_109 = arith.constant 2 : index
      %c0_110 = arith.constant 0 : index
      %c0_111 = arith.constant 0 : index
      %175 = vector.load %arg7[%c2_109, %c0_110, %c0_111] : memref<4x2x3xf32, #tpu.memory_space<vmem>>, vector<1x2x3xf32>
      %176 = vector.shape_cast %175 : vector<1x2x3xf32> to vector<2x3xf32>
      %c2_112 = arith.constant 2 : index
      %c0_113 = arith.constant 0 : index
      %c0_114 = arith.constant 0 : index
      %177 = vector.load %arg23[%c2_112, %c0_113, %c0_114] : memref<4x2x3xf32, #tpu.memory_space<vmem>>, vector<1x2x3xf32>
      %178 = vector.shape_cast %177 : vector<1x2x3xf32> to vector<2x3xf32>
      %179 = vector.broadcast %92 : vector<2x1xf32> to vector<2x3xf32>
      %180 = arith.mulf %178, %179 : vector<2x3xf32>
      %181 = arith.addf %176, %180 : vector<2x3xf32>
      %c2_115 = arith.constant 2 : index
      %c0_116 = arith.constant 0 : index
      %c0_117 = arith.constant 0 : index
      %182 = vector.load %arg21[%c2_115, %c0_116, %c0_117] : memref<4x2x3xf32, #tpu.memory_space<vmem>>, vector<1x2x3xf32>
      %183 = vector.shape_cast %182 : vector<1x2x3xf32> to vector<2x3xf32>
      %184 = vector.shape_cast %181 : vector<2x3xf32> to vector<1x2x3xf32>
      tpu.vector_store %arg21[%c2_115, %c0_116, %c0_117], %184 {strides = array<i32>} : memref<4x2x3xf32, #tpu.memory_space<vmem>>, vector<1x2x3xf32>,
      %c2_118 = arith.constant 2 : index
      %c0_119 = arith.constant 0 : index
      %c0_120 = arith.constant 0 : index
      %185 = vector.load %arg6[%c2_118, %c0_119, %c0_120] : memref<4x2x32xf32, #tpu.memory_space<vmem>>, vector<1x2x32xf32>
      %186 = vector.shape_cast %185 : vector<1x2x32xf32> to vector<2x32xf32>
      %c0_121 = arith.constant 0 : index
      %c0_122 = arith.constant 0 : index
      %187 = vector.load %arg15[%c0_121, %c0_122] : memref<32x32xf32, #tpu.memory_space<vmem>>, vector<32x32xf32>
      %cst_123 = arith.constant dense<0.000000e+00> : vector<2x32xf32>
      %188 = tpu.matmul %186, %187, %cst_123 {dimension_numbers = #tpu.dot_dimension_numbers<[1], [0], [0], [1], [0, 0, 1, 1], [], []>} : vector<2x32xf32>, vector<32x32xf32>, vector<2x32xf32> -> vector<2x32xf32>
      %c0_124 = arith.constant 0 : index
      %c0_125 = arith.constant 0 : index
      %189 = vector.load %arg16[%c0_124, %c0_125] : memref<32x32xf32, #tpu.memory_space<vmem>>, vector<32x32xf32>
      %cst_126 = arith.constant dense<0.000000e+00> : vector<2x32xf32>
      %190 = tpu.matmul %174, %189, %cst_126 {dimension_numbers = #tpu.dot_dimension_numbers<[1], [0], [0], [1], [0, 0, 1, 1], [], []>} : vector<2x32xf32>, vector<32x32xf32>, vector<2x32xf32> -> vector<2x32xf32>
      %191 = arith.addf %188, %190 : vector<2x32xf32>
      %c0_127 = arith.constant 0 : index
      %c0_128 = arith.constant 0 : index
      %192 = vector.load %arg17[%c0_127, %c0_128] : memref<1x32xf32, #tpu.memory_space<vmem>>, vector<1x32xf32>
      %193 = vector.broadcast %192 : vector<1x32xf32> to vector<2x32xf32>
      %194 = arith.addf %191, %193 : vector<2x32xf32>
      %195 = arith.negf %194 : vector<2x32xf32>
      %196 = math.exp %195 : vector<2x32xf32>
      %cst_129 = arith.constant 1.000000e+00 : f32
      %197 = vector.broadcast %cst_129 : f32 to vector<2x32xf32>
      %198 = arith.addf %197, %196 : vector<2x32xf32>
      %199 = arith.divf %197, %198 : vector<2x32xf32>
      %200 = arith.mulf %194, %199 : vector<2x32xf32>
      %c0_130 = arith.constant 0 : index
      %c0_131 = arith.constant 0 : index
      %201 = vector.load %arg18[%c0_130, %c0_131] : memref<32x32xf32, #tpu.memory_space<vmem>>, vector<32x32xf32>
      %cst_132 = arith.constant dense<0.000000e+00> : vector<2x32xf32>
      %202 = tpu.matmul %200, %201, %cst_132 {dimension_numbers = #tpu.dot_dimension_numbers<[1], [0], [0], [1], [0, 0, 1, 1], [], []>} : vector<2x32xf32>, vector<32x32xf32>, vector<2x32xf32> -> vector<2x32xf32>
      %c0_133 = arith.constant 0 : index
      %c0_134 = arith.constant 0 : index
      %203 = vector.load %arg19[%c0_133, %c0_134] : memref<1x32xf32, #tpu.memory_space<vmem>>, vector<1x32xf32>
      %204 = vector.broadcast %203 : vector<1x32xf32> to vector<2x32xf32>
      %205 = arith.addf %202, %204 : vector<2x32xf32>
      %206 = arith.addf %186, %205 : vector<2x32xf32>
      %c2_135 = arith.constant 2 : index
      %c0_136 = arith.constant 0 : index
      %c0_137 = arith.constant 0 : index
      %207 = vector.load %arg20[%c2_135, %c0_136, %c0_137] : memref<4x2x32xf32, #tpu.memory_space<vmem>>, vector<1x2x32xf32>
      %208 = vector.shape_cast %207 : vector<1x2x32xf32> to vector<2x32xf32>
      %209 = vector.shape_cast %206 : vector<2x32xf32> to vector<1x2x32xf32>
      tpu.vector_store %arg20[%c2_135, %c0_136, %c0_137], %209 {strides = array<i32>} : memref<4x2x32xf32, #tpu.memory_space<vmem>>, vector<1x2x32xf32>,
      %c3 = arith.constant 3 : index
      %c0_138 = arith.constant 0 : index
      %c0_139 = arith.constant 0 : index
      %210 = vector.load %arg22[%c3, %c0_138, %c0_139] : memref<4x2x32xf32, #tpu.memory_space<vmem>>, vector<1x2x32xf32>
      %211 = vector.shape_cast %210 : vector<1x2x32xf32> to vector<2x32xf32>
      %212 = vector.broadcast %92 : vector<2x1xf32> to vector<2x32xf32>
      %213 = arith.mulf %211, %212 : vector<2x32xf32>
      %c3_140 = arith.constant 3 : index
      %c0_141 = arith.constant 0 : index
      %c0_142 = arith.constant 0 : index
      %214 = vector.load %arg7[%c3_140, %c0_141, %c0_142] : memref<4x2x3xf32, #tpu.memory_space<vmem>>, vector<1x2x3xf32>
      %215 = vector.shape_cast %214 : vector<1x2x3xf32> to vector<2x3xf32>
      %c3_143 = arith.constant 3 : index
      %c0_144 = arith.constant 0 : index
      %c0_145 = arith.constant 0 : index
      %216 = vector.load %arg23[%c3_143, %c0_144, %c0_145] : memref<4x2x3xf32, #tpu.memory_space<vmem>>, vector<1x2x3xf32>
      %217 = vector.shape_cast %216 : vector<1x2x3xf32> to vector<2x3xf32>
      %218 = vector.broadcast %92 : vector<2x1xf32> to vector<2x3xf32>
      %219 = arith.mulf %217, %218 : vector<2x3xf32>
      %220 = arith.addf %215, %219 : vector<2x3xf32>
      %c3_146 = arith.constant 3 : index
      %c0_147 = arith.constant 0 : index
      %c0_148 = arith.constant 0 : index
      %221 = vector.load %arg21[%c3_146, %c0_147, %c0_148] : memref<4x2x3xf32, #tpu.memory_space<vmem>>, vector<1x2x3xf32>
      %222 = vector.shape_cast %221 : vector<1x2x3xf32> to vector<2x3xf32>
      %223 = vector.shape_cast %220 : vector<2x3xf32> to vector<1x2x3xf32>
      tpu.vector_store %arg21[%c3_146, %c0_147, %c0_148], %223 {strides = array<i32>} : memref<4x2x3xf32, #tpu.memory_space<vmem>>, vector<1x2x3xf32>,
      %c3_149 = arith.constant 3 : index
      %c0_150 = arith.constant 0 : index
      %c0_151 = arith.constant 0 : index
      %224 = vector.load %arg6[%c3_149, %c0_150, %c0_151] : memref<4x2x32xf32, #tpu.memory_space<vmem>>, vector<1x2x32xf32>
      %225 = vector.shape_cast %224 : vector<1x2x32xf32> to vector<2x32xf32>
      %c0_152 = arith.constant 0 : index
      %c0_153 = arith.constant 0 : index
      %226 = vector.load %arg15[%c0_152, %c0_153] : memref<32x32xf32, #tpu.memory_space<vmem>>, vector<32x32xf32>
      %cst_154 = arith.constant dense<0.000000e+00> : vector<2x32xf32>
      %227 = tpu.matmul %225, %226, %cst_154 {dimension_numbers = #tpu.dot_dimension_numbers<[1], [0], [0], [1], [0, 0, 1, 1], [], []>} : vector<2x32xf32>, vector<32x32xf32>, vector<2x32xf32> -> vector<2x32xf32>
      %c0_155 = arith.constant 0 : index
      %c0_156 = arith.constant 0 : index
      %228 = vector.load %arg16[%c0_155, %c0_156] : memref<32x32xf32, #tpu.memory_space<vmem>>, vector<32x32xf32>
      %cst_157 = arith.constant dense<0.000000e+00> : vector<2x32xf32>
      %229 = tpu.matmul %213, %228, %cst_157 {dimension_numbers = #tpu.dot_dimension_numbers<[1], [0], [0], [1], [0, 0, 1, 1], [], []>} : vector<2x32xf32>, vector<32x32xf32>, vector<2x32xf32> -> vector<2x32xf32>
      %230 = arith.addf %227, %229 : vector<2x32xf32>
      %c0_158 = arith.constant 0 : index
      %c0_159 = arith.constant 0 : index
      %231 = vector.load %arg17[%c0_158, %c0_159] : memref<1x32xf32, #tpu.memory_space<vmem>>, vector<1x32xf32>
      %232 = vector.broadcast %231 : vector<1x32xf32> to vector<2x32xf32>
      %233 = arith.addf %230, %232 : vector<2x32xf32>
      %234 = arith.negf %233 : vector<2x32xf32>
      %235 = math.exp %234 : vector<2x32xf32>
      %cst_160 = arith.constant 1.000000e+00 : f32
      %236 = vector.broadcast %cst_160 : f32 to vector<2x32xf32>
      %237 = arith.addf %236, %235 : vector<2x32xf32>
      %238 = arith.divf %236, %237 : vector<2x32xf32>
      %239 = arith.mulf %233, %238 : vector<2x32xf32>
      %c0_161 = arith.constant 0 : index
      %c0_162 = arith.constant 0 : index
      %240 = vector.load %arg18[%c0_161, %c0_162] : memref<32x32xf32, #tpu.memory_space<vmem>>, vector<32x32xf32>
      %cst_163 = arith.constant dense<0.000000e+00> : vector<2x32xf32>
      %241 = tpu.matmul %239, %240, %cst_163 {dimension_numbers = #tpu.dot_dimension_numbers<[1], [0], [0], [1], [0, 0, 1, 1], [], []>} : vector<2x32xf32>, vector<32x32xf32>, vector<2x32xf32> -> vector<2x32xf32>
      %c0_164 = arith.constant 0 : index
      %c0_165 = arith.constant 0 : index
      %242 = vector.load %arg19[%c0_164, %c0_165] : memref<1x32xf32, #tpu.memory_space<vmem>>, vector<1x32xf32>
      %243 = vector.broadcast %242 : vector<1x32xf32> to vector<2x32xf32>
      %244 = arith.addf %241, %243 : vector<2x32xf32>
      %245 = arith.addf %225, %244 : vector<2x32xf32>
      %c3_166 = arith.constant 3 : index
      %c0_167 = arith.constant 0 : index
      %c0_168 = arith.constant 0 : index
      %246 = vector.load %arg20[%c3_166, %c0_167, %c0_168] : memref<4x2x32xf32, #tpu.memory_space<vmem>>, vector<1x2x32xf32>
      %247 = vector.shape_cast %246 : vector<1x2x32xf32> to vector<2x32xf32>
      %248 = vector.shape_cast %245 : vector<2x32xf32> to vector<1x2x32xf32>
      tpu.vector_store %arg20[%c3_166, %c0_167, %c0_168], %248 {strides = array<i32>} : memref<4x2x32xf32, #tpu.memory_space<vmem>>, vector<1x2x32xf32>,
    } else {
    }
    return
  }
  func.func @transform_0(%arg0: i32, %arg1: i32) -> (i32, i32) {
    %c0_i32 = arith.constant 0 : i32
    %c0_i32_0 = arith.constant 0 : i32
    return %arg0, %c0_i32 : i32, i32
  }
  func.func @transform_1(%arg0: i32, %arg1: i32) -> (i32, i32) {
    %c0_i32 = arith.constant 0 : i32
    %c0_i32_0 = arith.constant 0 : i32
    return %arg0, %c0_i32 : i32, i32
  }
  func.func @transform_2(%arg0: i32, %arg1: i32) -> (i32, i32) {
    %c0_i32 = arith.constant 0 : i32
    %c0_i32_0 = arith.constant 0 : i32
    return %arg0, %c0_i32 : i32, i32
  }
  func.func @transform_3(%arg0: i32, %arg1: i32) -> (i32, i32, i32) {
    %c0_i32 = arith.constant 0 : i32
    %c0_i32_0 = arith.constant 0 : i32
    %c0_i32_1 = arith.constant 0 : i32
    %c0_i32_2 = arith.constant 0 : i32
    return %c0_i32, %c0_i32_0, %c0_i32_1 : i32, i32, i32
  }
  func.func @transform_4(%arg0: i32, %arg1: i32) -> (i32, i32, i32) {
    %c0_i32 = arith.constant 0 : i32
    %c0_i32_0 = arith.constant 0 : i32
    %c0_i32_1 = arith.constant 0 : i32
    %c0_i32_2 = arith.constant 0 : i32
    return %c0_i32, %c0_i32_0, %c0_i32_1 : i32, i32, i32
  }
  func.func @transform_5(%arg0: i32, %arg1: i32) -> (i32, i32, i32) {
    %c0_i32 = arith.constant 0 : i32
    %c0_i32_0 = arith.constant 0 : i32
    %c0_i32_1 = arith.constant 0 : i32
    %c0_i32_2 = arith.constant 0 : i32
    return %c0_i32, %c0_i32_0, %c0_i32_1 : i32, i32, i32
  }
  func.func @transform_6(%arg0: i32, %arg1: i32) -> (i32, i32) {
    %c0_i32 = arith.constant 0 : i32
    %c0_i32_0 = arith.constant 0 : i32
    %c0_i32_1 = arith.constant 0 : i32
    return %c0_i32, %c0_i32_0 : i32, i32
  }
  func.func @transform_7(%arg0: i32, %arg1: i32) -> (i32, i32) {
    %c0_i32 = arith.constant 0 : i32
    %c0_i32_0 = arith.constant 0 : i32
    %c0_i32_1 = arith.constant 0 : i32
    return %c0_i32, %c0_i32_0 : i32, i32
  }
  func.func @transform_8(%arg0: i32, %arg1: i32) -> (i32, i32) {
    %c0_i32 = arith.constant 0 : i32
    %c0_i32_0 = arith.constant 0 : i32
    %c0_i32_1 = arith.constant 0 : i32
    return %c0_i32, %c0_i32_0 : i32, i32
  }
  func.func @transform_9(%arg0: i32, %arg1: i32) -> (i32, i32) {
    %c0_i32 = arith.constant 0 : i32
    %c0_i32_0 = arith.constant 0 : i32
    %c0_i32_1 = arith.constant 0 : i32
    return %c0_i32, %c0_i32_0 : i32, i32
  }
  func.func @transform_10(%arg0: i32, %arg1: i32) -> (i32, i32) {
    %c0_i32 = arith.constant 0 : i32
    %c0_i32_0 = arith.constant 0 : i32
    %c0_i32_1 = arith.constant 0 : i32
    return %c0_i32, %c0_i32_0 : i32, i32
  }
  func.func @transform_11(%arg0: i32, %arg1: i32) -> (i32, i32) {
    %c0_i32 = arith.constant 0 : i32
    %c0_i32_0 = arith.constant 0 : i32
    %c0_i32_1 = arith.constant 0 : i32
    return %c0_i32, %c0_i32_0 : i32, i32
  }
  func.func @transform_12(%arg0: i32, %arg1: i32) -> (i32, i32) {
    %c0_i32 = arith.constant 0 : i32
    %c0_i32_0 = arith.constant 0 : i32
    %c0_i32_1 = arith.constant 0 : i32
    return %c0_i32, %c0_i32_0 : i32, i32
  }
  func.func @transform_13(%arg0: i32, %arg1: i32) -> (i32, i32) {
    %c0_i32 = arith.constant 0 : i32
    %c0_i32_0 = arith.constant 0 : i32
    %c0_i32_1 = arith.constant 0 : i32
    return %c0_i32, %c0_i32_0 : i32, i32
  }
  func.func @transform_14(%arg0: i32, %arg1: i32) -> (i32, i32) {
    %c0_i32 = arith.constant 0 : i32
    %c0_i32_0 = arith.constant 0 : i32
    %c0_i32_1 = arith.constant 0 : i32
    return %c0_i32, %c0_i32_0 : i32, i32
  }
  func.func @transform_15(%arg0: i32, %arg1: i32) -> (i32, i32) {
    %c0_i32 = arith.constant 0 : i32
    %c0_i32_0 = arith.constant 0 : i32
    %c0_i32_1 = arith.constant 0 : i32
    return %c0_i32, %c0_i32_0 : i32, i32
  }
  func.func @transform_16(%arg0: i32, %arg1: i32) -> (i32, i32) {
    %c0_i32 = arith.constant 0 : i32
    %c0_i32_0 = arith.constant 0 : i32
    %c0_i32_1 = arith.constant 0 : i32
    return %c0_i32, %c0_i32_0 : i32, i32
  }
  func.func @transform_17(%arg0: i32, %arg1: i32) -> (i32, i32) {
    %c0_i32 = arith.constant 0 : i32
    %c0_i32_0 = arith.constant 0 : i32
    %c0_i32_1 = arith.constant 0 : i32
    return %c0_i32, %c0_i32_0 : i32, i32
  }
  func.func @transform_18(%arg0: i32, %arg1: i32) -> (i32, i32, i32) {
    %c0_i32 = arith.constant 0 : i32
    %c0_i32_0 = arith.constant 0 : i32
    %c0_i32_1 = arith.constant 0 : i32
    %c0_i32_2 = arith.constant 0 : i32
    return %c0_i32, %c0_i32_0, %c0_i32_1 : i32, i32, i32
  }
  func.func @transform_19(%arg0: i32, %arg1: i32) -> (i32, i32, i32) {
    %c0_i32 = arith.constant 0 : i32
    %c0_i32_0 = arith.constant 0 : i32
    %c0_i32_1 = arith.constant 0 : i32
    %c0_i32_2 = arith.constant 0 : i32
    return %c0_i32, %c0_i32_0, %c0_i32_1 : i32, i32, i32
  }
}

</mosaic_0001>

<llo_original>
// kernel: tpu_custom_call.1
$region0: #{tpu_custom_call.1}
  #allocation0 [shape = 'u32[]', space=smem, size = 0x4, offset = 0x4, fixed_abs, tag = 'smem constant byte address 0x4 - core index']
  #allocation1 [shape = 'u32[72,128]{1,0:T(1,128)}', space=vmem, size = 0x9000, scoped, tag = 'internal scratch']
  #allocation2 [shape = 'f32[4,2,32]{2,1,0:T(2,128)}', space=vmem, size = 0x1000, scoped, tag = 'scratch operand']
  #allocation3 [shape = 'f32[4,2,3]{2,1,0:T(2,128)}', space=vmem, size = 0x1000, scoped, tag = 'scratch operand']
  %s0 = inlined_call_operand.vmem [shape: f32[32,32], index: 0, kind: input, shape index: {}]
  %s1 = inlined_call_operand.vmem [shape: f32[32,3], index: 1, kind: input, shape index: {}]
  %s2 = inlined_call_operand.vmem [shape: s32[32,1], index: 2, kind: input, shape index: {}]
  %s3 = inlined_call_operand.hbm [shape: f32[4,2,32], index: 3, kind: input, shape index: {}]
  %s4 = inlined_call_operand.hbm [shape: f32[4,2,32], index: 4, kind: input, shape index: {}]
  %s5 = inlined_call_operand.vmem [shape: f32[4,2,3], index: 5, kind: input, shape index: {}]
  %s6 = inlined_call_operand.vmem [shape: f32[2,1], index: 6, kind: input, shape index: {}]
  %s7 = inlined_call_operand.hbm [shape: f32[1,32], index: 7, kind: input, shape index: {}]
  %s8 = inlined_call_operand.hbm [shape: bf16[32,32], index: 8, kind: input, shape index: {}]
  %s9 = inlined_call_operand.hbm [shape: f32[1,32], index: 9, kind: input, shape index: {}]
  %s10 = inlined_call_operand.hbm [shape: bf16[32,32], index: 10, kind: input, shape index: {}]
  %s11 = inlined_call_operand.hbm [shape: f32[1,32], index: 11, kind: input, shape index: {}]
  %s12 = inlined_call_operand.hbm [shape: f32[1,32], index: 12, kind: input, shape index: {}]
  %s13 = inlined_call_operand.vmem [shape: f32[32,32], index: 13, kind: input, shape index: {}]
  %s14 = inlined_call_operand.vmem [shape: f32[32,32], index: 14, kind: input, shape index: {}]
  %s15 = inlined_call_operand.vmem [shape: f32[1,32], index: 15, kind: input, shape index: {}]
  %s16 = inlined_call_operand.hbm [shape: f32[32,32], index: 16, kind: input, shape index: {}]
  %s17 = inlined_call_operand.vmem [shape: f32[1,32], index: 17, kind: input, shape index: {}]
  %s18 = inlined_call_operand.hbm [shape: f32[4,2,32], index: 18, kind: output, shape index: {0}]
  %s19 = inlined_call_operand.vmem [shape: f32[4,2,3], index: 19, kind: output, shape index: {1}]
  %20 = xla_tuple %s18, %s19
  %s21 = sld [smem:[#allocation0]]
  $region157: #{tpu_custom_call.1} parent=0
    _
  %s23 = ssub.s32 1, %s21
  %s24 = scalar_select 0, %s23, %s21
  $region1: #{tpu_custom_call.1} parent=0
    #allocation4 [shape = 'u8[4096]{0}', space=vmem, size = 0x1000, scoped, tag = 'input window, operand 3, single buffered']
    #allocation5 [shape = 's32[2]{0}', space=sflag, size = 0x8, scoped, tag = 'scoped memory for tpu_custom_call.1']
    #allocation6 [shape = 's32[2]{0}', space=sflag, size = 0x8, scoped, tag = 'scoped memory for tpu_custom_call.1']
    #allocation7 [shape = 'u8[4096]{0}', space=vmem, size = 0x1000, scoped, tag = 'input window, operand 4, single buffered']
    #allocation8 [shape = 's32[1]{0}', space=sflag, size = 0x4, scoped, tag = 'scoped memory for tpu_custom_call.1']
    #allocation9 [shape = 'u8[512]{0}', space=vmem, size = 0x400, scoped, tag = 'input window, operand 7, single buffered']
    #allocation10 [shape = 'u8[8192]{0}', space=vmem, size = 0x2000, scoped, tag = 'input window, operand 8, single buffered']
    #allocation11 [shape = 's32[1]{0}', space=sflag, size = 0x4, scoped, tag = 'scoped memory for tpu_custom_call.1']
    #allocation12 [shape = 'u8[512]{0}', space=vmem, size = 0x400, scoped, tag = 'input window, operand 9, single buffered']
    #allocation13 [shape = 'u8[8192]{0}', space=vmem, size = 0x2000, scoped, tag = 'input window, operand 10, single buffered']
    #allocation14 [shape = 's32[1]{0}', space=sflag, size = 0x4, scoped, tag = 'scoped memory for tpu_custom_call.1']
    #allocation15 [shape = 'u8[512]{0}', space=vmem, size = 0x400, scoped, tag = 'input window, operand 11, single buffered']
    #allocation16 [shape = 'u8[512]{0}', space=vmem, size = 0x400, scoped, tag = 'input window, operand 12, single buffered']
    #allocation17 [shape = 's32[1]{0}', space=sflag, size = 0x4, scoped, tag = 'scoped memory for tpu_custom_call.1']
    #allocation18 [shape = 'u8[16384]{0}', space=vmem, size = 0x4000, scoped, tag = 'input window, operand 16, single buffered']
    #allocation19 [shape = 'u8[4096]{0}', space=vmem, size = 0x1000, scoped, tag = 'output window, operand 0, single buffered']
    %25 = vsyncpa [#allocation5], 0
    %26 = vsyncpa [#allocation8], 0
    %27 = vsyncpa [#allocation11], 0
    %28 = vsyncpa [#allocation14], 0
    %29 = vsyncpa [#allocation17], 0
    %30 = vsyncpa [#allocation6], 0
    loop: start=0, step=1, limit=10
    $region2: #{tpu_custom_call.1} parent=1 // loop_pre_header
      _
    $region3: #{tpu_custom_call.1} parent=1 // loop_header
      %s32 = sphi 0, %s36
      %p33 = scmp.ge.s32.totalorder %s32, 10
      %s39 = sphi 0, %s51
      %s40 = sphi 0, %s47
      %s41 = sphi 0, %s39
      %s42 = sphi 0, %s40
      %s43 = sphi 0, %s41
      %s44 = sphi 0, %s42
      %s54 = sphi 0, %s56
      %s57 = sphi 0, %s54
      %s58 = sphi 0, %s57
      %s74 = sphi 0, %s58
      %s80 = sphi 0, %s82
      %s83 = sphi 0, %s80
      %s84 = sphi 0, %s83
      %s100 = sphi 0, %s84
      %s106 = sphi 0, %s108
      %s109 = sphi 0, %s106
      %s110 = sphi 0, %s109
      %s126 = sphi 0, %s110
      %s130 = sphi 0, %s130
      %s132 = sphi 0, %s130
      %s133 = sphi 0, %s132
      %s147 = sphi 0, %s133
      %s151 = sphi 0, %s151
      %s153 = sphi 0, %s151
      %s154 = sphi 0, %s153
      %s168 = sphi 0, %s154
      %s172 = sphi 0, %s172
      %s174 = sphi 0, %s172
      %s175 = sphi 0, %s174
      %s189 = sphi 0, %s175
      %s193 = sphi 0, %s193
      %s195 = sphi 0, %s193
      %s196 = sphi 0, %s195
      %s210 = sphi 0, %s196
      %s214 = sphi 0, %s214
      %s216 = sphi 0, %s214
      %s217 = sphi 0, %s216
      %s231 = sphi 0, %s217
      %s235 = sphi 0, %s235
      %s237 = sphi 0, %s235
      %s238 = sphi 0, %s237
      %s252 = sphi 0, %s238
      %s256 = sphi 0, %s256
      %s258 = sphi 0, %s256
      %s259 = sphi 0, %s258
      %s273 = sphi 0, %s259
      %s277 = sphi 0, %s277
      %s279 = sphi 0, %s277
      %s280 = sphi 0, %s279
      %s294 = sphi 0, %s280
      %s298 = sphi 0, %s298
      %s300 = sphi 0, %s298
      %s301 = sphi 0, %s300
      %s315 = sphi 0, %s301
      %s319 = sphi 0, %s319
      %s321 = sphi 0, %s319
      %s322 = sphi 0, %s321
      %s336 = sphi 0, %s322
      %s340 = sphi 0, %s340
      %s342 = sphi 0, %s340
      %s343 = sphi 0, %s342
      %s357 = sphi 0, %s343
      %s361 = sphi 0, %s361
      %s363 = sphi 0, %s361
      %s364 = sphi 0, %s363
      %s378 = sphi 0, %s364
      %s382 = sphi 0, %s382
      %s384 = sphi 0, %s382
      %s385 = sphi 0, %s384
      %s399 = sphi 0, %s385
      %s403 = sphi 0, %s403
      %s405 = sphi 0, %s403
      %s406 = sphi 0, %s405
      %s420 = sphi 0, %s406
      %s424 = sphi 0, %s424
      %s426 = sphi 0, %s424
      %s427 = sphi 0, %s426
      %s441 = sphi 0, %s427
      %s445 = sphi 0, %s445
      %s447 = sphi 0, %s445
      %s448 = sphi 0, %s447
      %s462 = sphi 0, %s448
      %s466 = sphi 0, %s466
      %s468 = sphi 0, %s466
      %s469 = sphi 0, %s468
      %s483 = sphi 0, %s469
    $region4: #{tpu_custom_call.1} parent=1 // loop_header_branch
      %35 = sbr.rel (%p33) target = $region8
    $region5: #{tpu_custom_call.1} parent=1 // loop_body
      %s37 = ssub.s32 %s32, 1
      %s38 = ssub.s32 %s32, 2
      %s45 = sadd.s32 1, %s40
      %p46 = scmp.ge.s32.totalorder %s45, 4
      %s47 = scalar_select %p46, 0, %s45
      %s48 = sadd.s32 1, %s39
      %s49 = scalar_select %p46, %s48, %s39
      %p50 = scmp.ge.s32.totalorder %s49, 2
      %s51 = scalar_select %p50, 0, %s49
      %s52 = ssub.s32 %s39, %s51
      %p53 = scmp.eq.s32.totalorder %s52, 0
      %s55 = sadd.s32 %s54, 1
      %s56 = scalar_select %p53, %s54, %s55
      %p59 = pneg %p53
      %p60 = scmp.eq.s32.totalorder %s32, 7
      %p61 = por %p59, %p60
      %p62 = scmp.ne.s32.totalorder %s54, %s57
      %p63 = scmp.eq.s32.totalorder %s32, 0
      %p64 = por %p62, %p63
      %p65 = scmp.ne.s32.totalorder %s54, %s57
      %p66 = scmp.eq.s32.totalorder %s37, 7
      %p67 = por %p65, %p66
      %p68 = scmp.ne.s32.totalorder %s57, %s58
      %p69 = scmp.eq.s32.totalorder %s37, 0
      %p70 = por %p68, %p69
      %p71 = scmp.ne.s32.totalorder %s57, %s58
      %p72 = scmp.eq.s32.totalorder %s38, 7
      %p73 = por %p71, %p72
      %p75 = scmp.ne.s32.totalorder %s58, %s74
      %p76 = scmp.eq.s32.totalorder %s38, 0
      %p77 = por %p75, %p76
      %s78 = ssub.s32 %s39, %s51
      %p79 = scmp.eq.s32.totalorder %s78, 0
      %s81 = sadd.s32 %s80, 1
      %s82 = scalar_select %p79, %s80, %s81
      %p85 = pneg %p79
      %p86 = scmp.eq.s32.totalorder %s32, 7
      %p87 = por %p85, %p86
      %p88 = scmp.ne.s32.totalorder %s80, %s83
      %p89 = scmp.eq.s32.totalorder %s32, 0
      %p90 = por %p88, %p89
      %p91 = scmp.ne.s32.totalorder %s80, %s83
      %p92 = scmp.eq.s32.totalorder %s37, 7
      %p93 = por %p91, %p92
      %p94 = scmp.ne.s32.totalorder %s83, %s84
      %p95 = scmp.eq.s32.totalorder %s37, 0
      %p96 = por %p94, %p95
      %p97 = scmp.ne.s32.totalorder %s83, %s84
      %p98 = scmp.eq.s32.totalorder %s38, 7
      %p99 = por %p97, %p98
      %p101 = scmp.ne.s32.totalorder %s84, %s100
      %p102 = scmp.eq.s32.totalorder %s38, 0
      %p103 = por %p101, %p102
      %s104 = ssub.s32 %s39, %s51
      %p105 = scmp.eq.s32.totalorder %s104, 0
      %s107 = sadd.s32 %s106, 1
      %s108 = scalar_select %p105, %s106, %s107
      %p111 = pneg %p105
      %p112 = scmp.eq.s32.totalorder %s32, 7
      %p113 = por %p111, %p112
      %p114 = scmp.ne.s32.totalorder %s106, %s109
      %p115 = scmp.eq.s32.totalorder %s32, 0
      %p116 = por %p114, %p115
      %p117 = scmp.ne.s32.totalorder %s106, %s109
      %p118 = scmp.eq.s32.totalorder %s37, 7
      %p119 = por %p117, %p118
      %p120 = scmp.ne.s32.totalorder %s109, %s110
      %p121 = scmp.eq.s32.totalorder %s37, 0
      %p122 = por %p120, %p121
      %p123 = scmp.ne.s32.totalorder %s109, %s110
      %p124 = scmp.eq.s32.totalorder %s38, 7
      %p125 = por %p123, %p124
      %p127 = scmp.ne.s32.totalorder %s110, %s126
      %p128 = scmp.eq.s32.totalorder %s38, 0
      %p129 = por %p127, %p128
      %s131 = sadd.s32 %s130, 1
      %p134 = scmp.eq.s32.totalorder %s32, 7
      %p135 = scmp.ne.s32.totalorder %s130, %s132
      %p136 = scmp.eq.s32.totalorder %s32, 0
      %p137 = por %p135, %p136
      %p138 = scmp.ne.s32.totalorder %s130, %s132
      %p139 = scmp.eq.s32.totalorder %s37, 7
      %p140 = por %p138, %p139
      %p141 = scmp.ne.s32.totalorder %s132, %s133
      %p142 = scmp.eq.s32.totalorder %s37, 0
      %p143 = por %p141, %p142
      %p144 = scmp.ne.s32.totalorder %s132, %s133
      %p145 = scmp.eq.s32.totalorder %s38, 7
      %p146 = por %p144, %p145
      %p148 = scmp.ne.s32.totalorder %s133, %s147
      %p149 = scmp.eq.s32.totalorder %s38, 0
      %p150 = por %p148, %p149
      %s152 = sadd.s32 %s151, 1
      %p155 = scmp.eq.s32.totalorder %s32, 7
      %p156 = scmp.ne.s32.totalorder %s151, %s153
      %p157 = scmp.eq.s32.totalorder %s32, 0
      %p158 = por %p156, %p157
      %p159 = scmp.ne.s32.totalorder %s151, %s153
      %p160 = scmp.eq.s32.totalorder %s37, 7
      %p161 = por %p159, %p160
      %p162 = scmp.ne.s32.totalorder %s153, %s154
      %p163 = scmp.eq.s32.totalorder %s37, 0
      %p164 = por %p162, %p163
      %p165 = scmp.ne.s32.totalorder %s153, %s154
      %p166 = scmp.eq.s32.totalorder %s38, 7
      %p167 = por %p165, %p166
      %p169 = scmp.ne.s32.totalorder %s154, %s168
      %p170 = scmp.eq.s32.totalorder %s38, 0
      %p171 = por %p169, %p170
      %s173 = sadd.s32 %s172, 1
      %p176 = scmp.eq.s32.totalorder %s32, 7
      %p177 = scmp.ne.s32.totalorder %s172, %s174
      %p178 = scmp.eq.s32.totalorder %s32, 0
      %p179 = por %p177, %p178
      %p180 = scmp.ne.s32.totalorder %s172, %s174
      %p181 = scmp.eq.s32.totalorder %s37, 7
      %p182 = por %p180, %p181
      %p183 = scmp.ne.s32.totalorder %s174, %s175
      %p184 = scmp.eq.s32.totalorder %s37, 0
      %p185 = por %p183, %p184
      %p186 = scmp.ne.s32.totalorder %s174, %s175
      %p187 = scmp.eq.s32.totalorder %s38, 7
      %p188 = por %p186, %p187
      %p190 = scmp.ne.s32.totalorder %s175, %s189
      %p191 = scmp.eq.s32.totalorder %s38, 0
      %p192 = por %p190, %p191
      %s194 = sadd.s32 %s193, 1
      %p197 = scmp.eq.s32.totalorder %s32, 7
      %p198 = scmp.ne.s32.totalorder %s193, %s195
      %p199 = scmp.eq.s32.totalorder %s32, 0
      %p200 = por %p198, %p199
      %p201 = scmp.ne.s32.totalorder %s193, %s195
      %p202 = scmp.eq.s32.totalorder %s37, 7
      %p203 = por %p201, %p202
      %p204 = scmp.ne.s32.totalorder %s195, %s196
      %p205 = scmp.eq.s32.totalorder %s37, 0
      %p206 = por %p204, %p205
      %p207 = scmp.ne.s32.totalorder %s195, %s196
      %p208 = scmp.eq.s32.totalorder %s38, 7
      %p209 = por %p207, %p208
      %p211 = scmp.ne.s32.totalorder %s196, %s210
      %p212 = scmp.eq.s32.totalorder %s38, 0
      %p213 = por %p211, %p212
      %s215 = sadd.s32 %s214, 1
      %p218 = scmp.eq.s32.totalorder %s32, 7
      %p219 = scmp.ne.s32.totalorder %s214, %s216
      %p220 = scmp.eq.s32.totalorder %s32, 0
      %p221 = por %p219, %p220
      %p222 = scmp.ne.s32.totalorder %s214, %s216
      %p223 = scmp.eq.s32.totalorder %s37, 7
      %p224 = por %p222, %p223
      %p225 = scmp.ne.s32.totalorder %s216, %s217
      %p226 = scmp.eq.s32.totalorder %s37, 0
      %p227 = por %p225, %p226
      %p228 = scmp.ne.s32.totalorder %s216, %s217
      %p229 = scmp.eq.s32.totalorder %s38, 7
      %p230 = por %p228, %p229
      %p232 = scmp.ne.s32.totalorder %s217, %s231
      %p233 = scmp.eq.s32.totalorder %s38, 0
      %p234 = por %p232, %p233
      %s236 = sadd.s32 %s235, 1
      %p239 = scmp.eq.s32.totalorder %s32, 7
      %p240 = scmp.ne.s32.totalorder %s235, %s237
      %p241 = scmp.eq.s32.totalorder %s32, 0
      %p242 = por %p240, %p241
      %p243 = scmp.ne.s32.totalorder %s235, %s237
      %p244 = scmp.eq.s32.totalorder %s37, 7
      %p245 = por %p243, %p244
      %p246 = scmp.ne.s32.totalorder %s237, %s238
      %p247 = scmp.eq.s32.totalorder %s37, 0
      %p248 = por %p246, %p247
      %p249 = scmp.ne.s32.totalorder %s237, %s238
      %p250 = scmp.eq.s32.totalorder %s38, 7
      %p251 = por %p249, %p250
      %p253 = scmp.ne.s32.totalorder %s238, %s252
      %p254 = scmp.eq.s32.totalorder %s38, 0
      %p255 = por %p253, %p254
      %s257 = sadd.s32 %s256, 1
      %p260 = scmp.eq.s32.totalorder %s32, 7
      %p261 = scmp.ne.s32.totalorder %s256, %s258
      %p262 = scmp.eq.s32.totalorder %s32, 0
      %p263 = por %p261, %p262
      %p264 = scmp.ne.s32.totalorder %s256, %s258
      %p265 = scmp.eq.s32.totalorder %s37, 7
      %p266 = por %p264, %p265
      %p267 = scmp.ne.s32.totalorder %s258, %s259
      %p268 = scmp.eq.s32.totalorder %s37, 0
      %p269 = por %p267, %p268
      %p270 = scmp.ne.s32.totalorder %s258, %s259
      %p271 = scmp.eq.s32.totalorder %s38, 7
      %p272 = por %p270, %p271
      %p274 = scmp.ne.s32.totalorder %s259, %s273
      %p275 = scmp.eq.s32.totalorder %s38, 0
      %p276 = por %p274, %p275
      %s278 = sadd.s32 %s277, 1
      %p281 = scmp.eq.s32.totalorder %s32, 7
      %p282 = scmp.ne.s32.totalorder %s277, %s279
      %p283 = scmp.eq.s32.totalorder %s32, 0
      %p284 = por %p282, %p283
      %p285 = scmp.ne.s32.totalorder %s277, %s279
      %p286 = scmp.eq.s32.totalorder %s37, 7
      %p287 = por %p285, %p286
      %p288 = scmp.ne.s32.totalorder %s279, %s280
      %p289 = scmp.eq.s32.totalorder %s37, 0
      %p290 = por %p288, %p289
      %p291 = scmp.ne.s32.totalorder %s279, %s280
      %p292 = scmp.eq.s32.totalorder %s38, 7
      %p293 = por %p291, %p292
      %p295 = scmp.ne.s32.totalorder %s280, %s294
      %p296 = scmp.eq.s32.totalorder %s38, 0
      %p297 = por %p295, %p296
      %s299 = sadd.s32 %s298, 1
      %p302 = scmp.eq.s32.totalorder %s32, 7
      %p303 = scmp.ne.s32.totalorder %s298, %s300
      %p304 = scmp.eq.s32.totalorder %s32, 0
      %p305 = por %p303, %p304
      %p306 = scmp.ne.s32.totalorder %s298, %s300
      %p307 = scmp.eq.s32.totalorder %s37, 7
      %p308 = por %p306, %p307
      %p309 = scmp.ne.s32.totalorder %s300, %s301
      %p310 = scmp.eq.s32.totalorder %s37, 0
      %p311 = por %p309, %p310
      %p312 = scmp.ne.s32.totalorder %s300, %s301
      %p313 = scmp.eq.s32.totalorder %s38, 7
      %p314 = por %p312, %p313
      %p316 = scmp.ne.s32.totalorder %s301, %s315
      %p317 = scmp.eq.s32.totalorder %s38, 0
      %p318 = por %p316, %p317
      %s320 = sadd.s32 %s319, 1
      %p323 = scmp.eq.s32.totalorder %s32, 7
      %p324 = scmp.ne.s32.totalorder %s319, %s321
      %p325 = scmp.eq.s32.totalorder %s32, 0
      %p326 = por %p324, %p325
      %p327 = scmp.ne.s32.totalorder %s319, %s321
      %p328 = scmp.eq.s32.totalorder %s37, 7
      %p329 = por %p327, %p328
      %p330 = scmp.ne.s32.totalorder %s321, %s322
      %p331 = scmp.eq.s32.totalorder %s37, 0
      %p332 = por %p330, %p331
      %p333 = scmp.ne.s32.totalorder %s321, %s322
      %p334 = scmp.eq.s32.totalorder %s38, 7
      %p335 = por %p333, %p334
      %p337 = scmp.ne.s32.totalorder %s322, %s336
      %p338 = scmp.eq.s32.totalorder %s38, 0
      %p339 = por %p337, %p338
      %s341 = sadd.s32 %s340, 1
      %p344 = scmp.eq.s32.totalorder %s32, 7
      %p345 = scmp.ne.s32.totalorder %s340, %s342
      %p346 = scmp.eq.s32.totalorder %s32, 0
      %p347 = por %p345, %p346
      %p348 = scmp.ne.s32.totalorder %s340, %s342
      %p349 = scmp.eq.s32.totalorder %s37, 7
      %p350 = por %p348, %p349
      %p351 = scmp.ne.s32.totalorder %s342, %s343
      %p352 = scmp.eq.s32.totalorder %s37, 0
      %p353 = por %p351, %p352
      %p354 = scmp.ne.s32.totalorder %s342, %s343
      %p355 = scmp.eq.s32.totalorder %s38, 7
      %p356 = por %p354, %p355
      %p358 = scmp.ne.s32.totalorder %s343, %s357
      %p359 = scmp.eq.s32.totalorder %s38, 0
      %p360 = por %p358, %p359
      %s362 = sadd.s32 %s361, 1
      %p365 = scmp.eq.s32.totalorder %s32, 7
      %p366 = scmp.ne.s32.totalorder %s361, %s363
      %p367 = scmp.eq.s32.totalorder %s32, 0
      %p368 = por %p366, %p367
      %p369 = scmp.ne.s32.totalorder %s361, %s363
      %p370 = scmp.eq.s32.totalorder %s37, 7
      %p371 = por %p369, %p370
      %p372 = scmp.ne.s32.totalorder %s363, %s364
      %p373 = scmp.eq.s32.totalorder %s37, 0
      %p374 = por %p372, %p373
      %p375 = scmp.ne.s32.totalorder %s363, %s364
      %p376 = scmp.eq.s32.totalorder %s38, 7
      %p377 = por %p375, %p376
      %p379 = scmp.ne.s32.totalorder %s364, %s378
      %p380 = scmp.eq.s32.totalorder %s38, 0
      %p381 = por %p379, %p380
      %s383 = sadd.s32 %s382, 1
      %p386 = scmp.eq.s32.totalorder %s32, 7
      %p387 = scmp.ne.s32.totalorder %s382, %s384
      %p388 = scmp.eq.s32.totalorder %s32, 0
      %p389 = por %p387, %p388
      %p390 = scmp.ne.s32.totalorder %s382, %s384
      %p391 = scmp.eq.s32.totalorder %s37, 7
      %p392 = por %p390, %p391
      %p393 = scmp.ne.s32.totalorder %s384, %s385
      %p394 = scmp.eq.s32.totalorder %s37, 0
      %p395 = por %p393, %p394
      %p396 = scmp.ne.s32.totalorder %s384, %s385
      %p397 = scmp.eq.s32.totalorder %s38, 7
      %p398 = por %p396, %p397
      %p400 = scmp.ne.s32.totalorder %s385, %s399
      %p401 = scmp.eq.s32.totalorder %s38, 0
      %p402 = por %p400, %p401
      %s404 = sadd.s32 %s403, 1
      %p407 = scmp.eq.s32.totalorder %s32, 7
      %p408 = scmp.ne.s32.totalorder %s403, %s405
      %p409 = scmp.eq.s32.totalorder %s32, 0
      %p410 = por %p408, %p409
      %p411 = scmp.ne.s32.totalorder %s403, %s405
      %p412 = scmp.eq.s32.totalorder %s37, 7
      %p413 = por %p411, %p412
      %p414 = scmp.ne.s32.totalorder %s405, %s406
      %p415 = scmp.eq.s32.totalorder %s37, 0
      %p416 = por %p414, %p415
      %p417 = scmp.ne.s32.totalorder %s405, %s406
      %p418 = scmp.eq.s32.totalorder %s38, 7
      %p419 = por %p417, %p418
      %p421 = scmp.ne.s32.totalorder %s406, %s420
      %p422 = scmp.eq.s32.totalorder %s38, 0
      %p423 = por %p421, %p422
      %s425 = sadd.s32 %s424, 1
      %p428 = scmp.eq.s32.totalorder %s32, 7
      %p429 = scmp.ne.s32.totalorder %s424, %s426
      %p430 = scmp.eq.s32.totalorder %s32, 0
      %p431 = por %p429, %p430
      %p432 = scmp.ne.s32.totalorder %s424, %s426
      %p433 = scmp.eq.s32.totalorder %s37, 7
      %p434 = por %p432, %p433
      %p435 = scmp.ne.s32.totalorder %s426, %s427
      %p436 = scmp.eq.s32.totalorder %s37, 0
      %p437 = por %p435, %p436
      %p438 = scmp.ne.s32.totalorder %s426, %s427
      %p439 = scmp.eq.s32.totalorder %s38, 7
      %p440 = por %p438, %p439
      %p442 = scmp.ne.s32.totalorder %s427, %s441
      %p443 = scmp.eq.s32.totalorder %s38, 0
      %p444 = por %p442, %p443
      %s446 = sadd.s32 %s445, 1
      %p449 = scmp.eq.s32.totalorder %s32, 7
      %p450 = scmp.ne.s32.totalorder %s445, %s447
      %p451 = scmp.eq.s32.totalorder %s32, 0
      %p452 = por %p450, %p451
      %p453 = scmp.ne.s32.totalorder %s445, %s447
      %p454 = scmp.eq.s32.totalorder %s37, 7
      %p455 = por %p453, %p454
      %p456 = scmp.ne.s32.totalorder %s447, %s448
      %p457 = scmp.eq.s32.totalorder %s37, 0
      %p458 = por %p456, %p457
      %p459 = scmp.ne.s32.totalorder %s447, %s448
      %p460 = scmp.eq.s32.totalorder %s38, 7
      %p461 = por %p459, %p460
      %p463 = scmp.ne.s32.totalorder %s448, %s462
      %p464 = scmp.eq.s32.totalorder %s38, 0
      %p465 = por %p463, %p464
      %s467 = sadd.s32 %s466, 1
      %p470 = scmp.eq.s32.totalorder %s32, 7
      %p471 = scmp.ne.s32.totalorder %s466, %s468
      %p472 = scmp.eq.s32.totalorder %s32, 0
      %p473 = por %p471, %p472
      %p474 = scmp.ne.s32.totalorder %s466, %s468
      %p475 = scmp.eq.s32.totalorder %s37, 7
      %p476 = por %p474, %p475
      %p477 = scmp.ne.s32.totalorder %s468, %s469
      %p478 = scmp.eq.s32.totalorder %s37, 0
      %p479 = por %p477, %p478
      %p480 = scmp.ne.s32.totalorder %s468, %s469
      %p481 = scmp.eq.s32.totalorder %s38, 7
      %p482 = por %p480, %p481
      %p484 = scmp.ne.s32.totalorder %s469, %s483
      %p485 = scmp.eq.s32.totalorder %s38, 0
      %p486 = por %p484, %p485
      %p487 = scmp.le.s32.totalorder 1, %s32
      %p488 = scmp.lt.s32.totalorder %s32, 9
      %p489 = pnand %p487, %p488
      %p490 = pneg %p489
      // Predicated region
      $region9: #{tpu_custom_call.1} parent=5 // pred_check
        _
      $region10: #{tpu_custom_call.1} parent=5 // pred_check_branch
        %492 = sbr.rel (%p489) target = $region12
      $region11: #{tpu_custom_call.1} parent=5 // pred_region
        %s493 = ssub.s32 %s32, 1
        // Predicated region
        $region13: #{tpu_custom_call.1} parent=11 // pred_check
          %p494 = pneg %p143
        $region14: #{tpu_custom_call.1} parent=11 // pred_check_branch
          %496 = sbr.rel (%p494) target = $region16
        $region15: #{tpu_custom_call.1} parent=11 // pred_region
          %498 = vsyncadd [#allocation5], 0
          %s499 = sshll.u32 %s3, 4
          %s500 = int_to_ptr.hbm [resolvable:$true] %s499
          %s501 = sshll.u32 [#allocation4], 4
          %s502 = int_to_ptr.vmem [resolvable:$true] %s501
          %507 = dma.hbm_to_vmem [thread:$0]  %s500, 128, %s502, [#allocation5], 32, 32, 2
        $region16: #{tpu_custom_call.1} parent=11 // pred_fallthru
          _
        // Predicated region
        $region17: #{tpu_custom_call.1} parent=11 // pred_check
          %p508 = pneg %p164
        $region18: #{tpu_custom_call.1} parent=11 // pred_check_branch
          %510 = sbr.rel (%p508) target = $region20
        $region19: #{tpu_custom_call.1} parent=11 // pred_region
          %512 = vsyncadd [#allocation8], 0
          %s513 = sshll.u32 %s4, 4
          %s514 = int_to_ptr.hbm [resolvable:$true] %s513
          %s515 = sshll.u32 [#allocation7], 4
          %s516 = int_to_ptr.vmem [resolvable:$true] %s515
          %521 = dma.hbm_to_vmem [thread:$0]  %s514, 128, %s516, [#allocation8], 32, 32, 2
        $region20: #{tpu_custom_call.1} parent=11 // pred_fallthru
          _
        // Predicated region
        $region21: #{tpu_custom_call.1} parent=11 // pred_check
          %p522 = pneg %p185
        $region22: #{tpu_custom_call.1} parent=11 // pred_check_branch
          %524 = sbr.rel (%p522) target = $region24
        $region23: #{tpu_custom_call.1} parent=11 // pred_region
          _
        $region24: #{tpu_custom_call.1} parent=11 // pred_fallthru
          _
        // Predicated region
        $region25: #{tpu_custom_call.1} parent=11 // pred_check
          %p525 = pneg %p206
        $region26: #{tpu_custom_call.1} parent=11 // pred_check_branch
          %527 = sbr.rel (%p525) target = $region28
        $region27: #{tpu_custom_call.1} parent=11 // pred_region
          _
        $region28: #{tpu_custom_call.1} parent=11 // pred_fallthru
          _
        // Predicated region
        $region29: #{tpu_custom_call.1} parent=11 // pred_check
          %p528 = pneg %p227
        $region30: #{tpu_custom_call.1} parent=11 // pred_check_branch
          %530 = sbr.rel (%p528) target = $region32
        $region31: #{tpu_custom_call.1} parent=11 // pred_region
          %532 = vsyncadd [#allocation8], 0
          %s534 = sshll.u32 %s7, 4
          %s535 = int_to_ptr.hbm [resolvable:$true] %s534
          %s536 = sshll.u32 [#allocation9], 4
          %s537 = int_to_ptr.vmem [resolvable:$true] %s536
          %539 = dma.hbm_to_vmem [thread:$0]  %s535, 16, %s537, [#allocation8]
        $region32: #{tpu_custom_call.1} parent=11 // pred_fallthru
          _
        // Predicated region
        $region33: #{tpu_custom_call.1} parent=11 // pred_check
          %p540 = pneg %p248
        $region34: #{tpu_custom_call.1} parent=11 // pred_check_branch
          %542 = sbr.rel (%p540) target = $region36
        $region35: #{tpu_custom_call.1} parent=11 // pred_region
          %544 = vsyncadd [#allocation11], 0
          %s545 = sshll.u32 %s8, 4
          %s546 = int_to_ptr.hbm [resolvable:$true] %s545
          %s547 = sshll.u32 [#allocation10], 4
          %s548 = int_to_ptr.vmem [resolvable:$true] %s547
          %553 = dma.hbm_to_vmem [thread:$0]  %s546, 256, %s548, [#allocation11], 64, 64, 4
        $region36: #{tpu_custom_call.1} parent=11 // pred_fallthru
          _
        // Predicated region
        $region37: #{tpu_custom_call.1} parent=11 // pred_check
          %p554 = pneg %p269
        $region38: #{tpu_custom_call.1} parent=11 // pred_check_branch
          %556 = sbr.rel (%p554) target = $region40
        $region39: #{tpu_custom_call.1} parent=11 // pred_region
          %558 = vsyncadd [#allocation11], 0
          %s560 = sshll.u32 %s9, 4
          %s561 = int_to_ptr.hbm [resolvable:$true] %s560
          %s562 = sshll.u32 [#allocation12], 4
          %s563 = int_to_ptr.vmem [resolvable:$true] %s562
          %565 = dma.hbm_to_vmem [thread:$0]  %s561, 16, %s563, [#allocation11]
        $region40: #{tpu_custom_call.1} parent=11 // pred_fallthru
          _
        // Predicated region
        $region41: #{tpu_custom_call.1} parent=11 // pred_check
          %p566 = pneg %p290
        $region42: #{tpu_custom_call.1} parent=11 // pred_check_branch
          %568 = sbr.rel (%p566) target = $region44
        $region43: #{tpu_custom_call.1} parent=11 // pred_region
          %570 = vsyncadd [#allocation14], 0
          %s571 = sshll.u32 %s10, 4
          %s572 = int_to_ptr.hbm [resolvable:$true] %s571
          %s573 = sshll.u32 [#allocation13], 4
          %s574 = int_to_ptr.vmem [resolvable:$true] %s573
          %579 = dma.hbm_to_vmem [thread:$0]  %s572, 256, %s574, [#allocation14], 64, 64, 4
        $region44: #{tpu_custom_call.1} parent=11 // pred_fallthru
          _
        // Predicated region
        $region45: #{tpu_custom_call.1} parent=11 // pred_check
          %p580 = pneg %p311
        $region46: #{tpu_custom_call.1} parent=11 // pred_check_branch
          %582 = sbr.rel (%p580) target = $region48
        $region47: #{tpu_custom_call.1} parent=11 // pred_region
          %584 = vsyncadd [#allocation14], 0
          %s586 = sshll.u32 %s11, 4
          %s587 = int_to_ptr.hbm [resolvable:$true] %s586
          %s588 = sshll.u32 [#allocation15], 4
          %s589 = int_to_ptr.vmem [resolvable:$true] %s588
          %591 = dma.hbm_to_vmem [thread:$0]  %s587, 16, %s589, [#allocation14]
        $region48: #{tpu_custom_call.1} parent=11 // pred_fallthru
          _
        // Predicated region
        $region49: #{tpu_custom_call.1} parent=11 // pred_check
          %p592 = pneg %p332
        $region50: #{tpu_custom_call.1} parent=11 // pred_check_branch
          %594 = sbr.rel (%p592) target = $region52
        $region51: #{tpu_custom_call.1} parent=11 // pred_region
          %596 = vsyncadd [#allocation17], 0
          %s598 = sshll.u32 %s12, 4
          %s599 = int_to_ptr.hbm [resolvable:$true] %s598
          %s600 = sshll.u32 [#allocation16], 4
          %s601 = int_to_ptr.vmem [resolvable:$true] %s600
          %603 = dma.hbm_to_vmem [thread:$0]  %s599, 16, %s601, [#allocation17]
        $region52: #{tpu_custom_call.1} parent=11 // pred_fallthru
          _
        // Predicated region
        $region53: #{tpu_custom_call.1} parent=11 // pred_check
          %p604 = pneg %p353
        $region54: #{tpu_custom_call.1} parent=11 // pred_check_branch
          %606 = sbr.rel (%p604) target = $region56
        $region55: #{tpu_custom_call.1} parent=11 // pred_region
          _
        $region56: #{tpu_custom_call.1} parent=11 // pred_fallthru
          _
        // Predicated region
        $region57: #{tpu_custom_call.1} parent=11 // pred_check
          %p607 = pneg %p374
        $region58: #{tpu_custom_call.1} parent=11 // pred_check_branch
          %609 = sbr.rel (%p607) target = $region60
        $region59: #{tpu_custom_call.1} parent=11 // pred_region
          _
        $region60: #{tpu_custom_call.1} parent=11 // pred_fallthru
          _
        // Predicated region
        $region61: #{tpu_custom_call.1} parent=11 // pred_check
          %p610 = pneg %p395
        $region62: #{tpu_custom_call.1} parent=11 // pred_check_branch
          %612 = sbr.rel (%p610) target = $region64
        $region63: #{tpu_custom_call.1} parent=11 // pred_region
          _
        $region64: #{tpu_custom_call.1} parent=11 // pred_fallthru
          _
        // Predicated region
        $region65: #{tpu_custom_call.1} parent=11 // pred_check
          %p613 = pneg %p416
        $region66: #{tpu_custom_call.1} parent=11 // pred_check_branch
          %615 = sbr.rel (%p613) target = $region68
        $region67: #{tpu_custom_call.1} parent=11 // pred_region
          %617 = vsyncadd [#allocation17], 0
          %s618 = sshll.u32 %s16, 4
          %s619 = int_to_ptr.hbm [resolvable:$true] %s618
          %s620 = sshll.u32 [#allocation18], 4
          %s621 = int_to_ptr.vmem [resolvable:$true] %s620
          %626 = dma.hbm_to_vmem [thread:$0]  %s619, 512, %s621, [#allocation17], 128, 128, 8
        $region68: #{tpu_custom_call.1} parent=11 // pred_fallthru
          _
        // Predicated region
        $region69: #{tpu_custom_call.1} parent=11 // pred_check
          %p627 = pneg %p437
        $region70: #{tpu_custom_call.1} parent=11 // pred_check_branch
          %629 = sbr.rel (%p627) target = $region72
        $region71: #{tpu_custom_call.1} parent=11 // pred_region
          _
        $region72: #{tpu_custom_call.1} parent=11 // pred_fallthru
          _
      $region12: #{tpu_custom_call.1} parent=5 // pred_fallthru
        _
      %p630 = scmp.lt.s32.totalorder %s32, 8
      // Predicated region
      $region73: #{tpu_custom_call.1} parent=5 // pred_check
        %p631 = pneg %p630
      $region74: #{tpu_custom_call.1} parent=5 // pred_check_branch
        %633 = sbr.rel (%p631) target = $region76
      $region75: #{tpu_custom_call.1} parent=5 // pred_region
        // Predicated region
        $region77: #{tpu_custom_call.1} parent=75 // pred_check
          %p634 = pneg %p64
        $region78: #{tpu_custom_call.1} parent=75 // pred_check_branch
          %636 = sbr.rel (%p634) target = $region80
        $region79: #{tpu_custom_call.1} parent=75 // pred_region
          %s637 = smul.u32 2, %s39
          %p638 = scmp.lt.s32.totalorder %s637, 3
          %s639 = scalar_select %p638, %s637, 3
          %s640 = smul.addr %s639, 8
          %s641 = scalar_lea.vmem %s0, %s640
          %s642 = smul.u32 2, %s39
        $region80: #{tpu_custom_call.1} parent=75 // pred_fallthru
          _
        // Predicated region
        $region81: #{tpu_custom_call.1} parent=75 // pred_check
          %p643 = pneg %p90
        $region82: #{tpu_custom_call.1} parent=75 // pred_check_branch
          %645 = sbr.rel (%p643) target = $region84
        $region83: #{tpu_custom_call.1} parent=75 // pred_region
          %s646 = smul.u32 2, %s39
          %p647 = scmp.lt.s32.totalorder %s646, 3
          %s648 = scalar_select %p647, %s646, 3
          %s649 = smul.addr %s648, 8
          %s650 = scalar_lea.vmem %s1, %s649
          %s651 = smul.u32 2, %s39
        $region84: #{tpu_custom_call.1} parent=75 // pred_fallthru
          _
        // Predicated region
        $region85: #{tpu_custom_call.1} parent=75 // pred_check
          %p652 = pneg %p116
        $region86: #{tpu_custom_call.1} parent=75 // pred_check_branch
          %654 = sbr.rel (%p652) target = $region88
        $region87: #{tpu_custom_call.1} parent=75 // pred_region
          %s655 = smul.u32 2, %s39
          %p656 = scmp.lt.s32.totalorder %s655, 3
          %s657 = scalar_select %p656, %s655, 3
          %s658 = smul.addr %s657, 8
          %s659 = scalar_lea.vmem %s2, %s658
          %s660 = smul.u32 2, %s39
        $region88: #{tpu_custom_call.1} parent=75 // pred_fallthru
          _
      $region76: #{tpu_custom_call.1} parent=5 // pred_fallthru
        _
      %p661 = scmp.le.s32.totalorder 1, %s32
      %p662 = scmp.lt.s32.totalorder %s32, 9
      %p663 = pnand %p661, %p662
      %p664 = pneg %p663
      // Predicated region
      $region89: #{tpu_custom_call.1} parent=5 // pred_check
        _
      $region90: #{tpu_custom_call.1} parent=5 // pred_check_branch
        %666 = sbr.rel (%p663) target = $region92
      $region91: #{tpu_custom_call.1} parent=5 // pred_region
        %s667 = ssub.s32 %s32, 1
        // Predicated region
        $region93: #{tpu_custom_call.1} parent=91 // pred_check
          %p668 = pneg %p143
        $region94: #{tpu_custom_call.1} parent=91 // pred_check_branch
          %670 = sbr.rel (%p668) target = $region96
        $region95: #{tpu_custom_call.1} parent=91 // pred_region
          %672 = dma.done [#allocation5], 128
        $region96: #{tpu_custom_call.1} parent=91 // pred_fallthru
          _
        // Predicated region
        $region97: #{tpu_custom_call.1} parent=91 // pred_check
          %p673 = pneg %p164
        $region98: #{tpu_custom_call.1} parent=91 // pred_check_branch
          %675 = sbr.rel (%p673) target = $region100
        $region99: #{tpu_custom_call.1} parent=91 // pred_region
          %677 = dma.done [#allocation8], 128
        $region100: #{tpu_custom_call.1} parent=91 // pred_fallthru
          _
        // Predicated region
        $region101: #{tpu_custom_call.1} parent=91 // pred_check
          %p678 = pneg %p227
        $region102: #{tpu_custom_call.1} parent=91 // pred_check_branch
          %680 = sbr.rel (%p678) target = $region104
        $region103: #{tpu_custom_call.1} parent=91 // pred_region
          %682 = dma.done [#allocation8], 16
        $region104: #{tpu_custom_call.1} parent=91 // pred_fallthru
          _
        // Predicated region
        $region105: #{tpu_custom_call.1} parent=91 // pred_check
          %p683 = pneg %p248
        $region106: #{tpu_custom_call.1} parent=91 // pred_check_branch
          %685 = sbr.rel (%p683) target = $region108
        $region107: #{tpu_custom_call.1} parent=91 // pred_region
          %687 = dma.done [#allocation11], 256
        $region108: #{tpu_custom_call.1} parent=91 // pred_fallthru
          _
        // Predicated region
        $region109: #{tpu_custom_call.1} parent=91 // pred_check
          %p688 = pneg %p269
        $region110: #{tpu_custom_call.1} parent=91 // pred_check_branch
          %690 = sbr.rel (%p688) target = $region112
        $region111: #{tpu_custom_call.1} parent=91 // pred_region
          %692 = dma.done [#allocation11], 16
        $region112: #{tpu_custom_call.1} parent=91 // pred_fallthru
          _
        // Predicated region
        $region113: #{tpu_custom_call.1} parent=91 // pred_check
          %p693 = pneg %p290
        $region114: #{tpu_custom_call.1} parent=91 // pred_check_branch
          %695 = sbr.rel (%p693) target = $region116
        $region115: #{tpu_custom_call.1} parent=91 // pred_region
          %697 = dma.done [#allocation14], 256
        $region116: #{tpu_custom_call.1} parent=91 // pred_fallthru
          _
        // Predicated region
        $region117: #{tpu_custom_call.1} parent=91 // pred_check
          %p698 = pneg %p311
        $region118: #{tpu_custom_call.1} parent=91 // pred_check_branch
          %700 = sbr.rel (%p698) target = $region120
        $region119: #{tpu_custom_call.1} parent=91 // pred_region
          %702 = dma.done [#allocation14], 16
        $region120: #{tpu_custom_call.1} parent=91 // pred_fallthru
          _
        // Predicated region
        $region121: #{tpu_custom_call.1} parent=91 // pred_check
          %p703 = pneg %p332
        $region122: #{tpu_custom_call.1} parent=91 // pred_check_branch
          %705 = sbr.rel (%p703) target = $region124
        $region123: #{tpu_custom_call.1} parent=91 // pred_region
          %707 = dma.done [#allocation17], 16
        $region124: #{tpu_custom_call.1} parent=91 // pred_fallthru
          _
        // Predicated region
        $region125: #{tpu_custom_call.1} parent=91 // pred_check
          %p708 = pneg %p416
        $region126: #{tpu_custom_call.1} parent=91 // pred_check_branch
          %710 = sbr.rel (%p708) target = $region128
        $region127: #{tpu_custom_call.1} parent=91 // pred_region
          %712 = dma.done [#allocation17], 512
        $region128: #{tpu_custom_call.1} parent=91 // pred_fallthru
          _
        %s713 = smul.u32 2, %s41
        %p714 = scmp.lt.s32.totalorder %s713, 3
        %s715 = scalar_select %p714, %s713, 3
        %s716 = smul.addr %s715, 8
        %s717 = scalar_lea.vmem %s0, %s716
        %p718 = pneg %p70
        %p719 = pneg %p67
        %s720 = smul.u32 2, %s41
        %p721 = scmp.lt.s32.totalorder %s720, 3
        %s722 = scalar_select %p721, %s720, 3
        %s723 = smul.addr %s722, 8
        %s724 = scalar_lea.vmem %s1, %s723
        %p725 = pneg %p96
        %p726 = pneg %p93
        %s727 = smul.u32 2, %s41
        %p728 = scmp.lt.s32.totalorder %s727, 3
        %s729 = scalar_select %p728, %s727, 3
        %s730 = smul.addr %s729, 8
        %s731 = scalar_lea.vmem %s2, %s730
        %p732 = pneg %p122
        %p733 = pneg %p119
        %p734 = pneg %p143
        %p735 = pneg %p140
        %p736 = pneg %p164
        %p737 = pneg %p161
        %p738 = pneg %p185
        %p739 = pneg %p182
        %p740 = pneg %p206
        %p741 = pneg %p203
        %p742 = pneg %p227
        %p743 = pneg %p224
        %p744 = pneg %p248
        %p745 = pneg %p245
        %p746 = pneg %p269
        %p747 = pneg %p266
        %p748 = pneg %p290
        %p749 = pneg %p287
        %p750 = pneg %p311
        %p751 = pneg %p308
        %p752 = pneg %p332
        %p753 = pneg %p329
        %p754 = pneg %p353
        %p755 = pneg %p350
        %p756 = pneg %p374
        %p757 = pneg %p371
        %p758 = pneg %p395
        %p759 = pneg %p392
        %p760 = pneg %p416
        %p761 = pneg %p413
        %p762 = pneg %p437
        %p763 = pneg %p434
        %p764 = pneg %p458
        %p765 = pneg %p455
        %p766 = pneg %p479
        %p767 = pneg %p476
        %s768 = smul.u32 2, %s41
        %p769 = scmp.lt.s32.totalorder %s768, 3
        %s770 = scalar_select %p769, %s768, 3
        %s771 = smul.addr %s770, 8
        %s772 = scalar_lea.vmem %s0, %s771
        %s773 = smul.u32 2, %s41
        %s774 = smul.u32 2, %s41
        %p775 = scmp.lt.s32.totalorder %s774, 3
        %s776 = scalar_select %p775, %s774, 3
        %s777 = smul.addr %s776, 8
        %s778 = scalar_lea.vmem %s1, %s777
        %s779 = smul.u32 2, %s41
        %s780 = smul.u32 2, %s41
        %p781 = scmp.lt.s32.totalorder %s780, 3
        %s782 = scalar_select %p781, %s780, 3
        %s783 = smul.addr %s782, 8
        %s784 = scalar_lea.vmem %s2, %s783
        %s785 = smul.u32 2, %s41
        %p787 = scmp.eq.s32.totalorder %s41, 1
        %p788 = scmp.eq.s32.totalorder %s42, 3
        %p789 = pnand %p787, %p788
        %p790 = pneg %p789
        %p791 = scmp.eq.s32.totalorder %s41, 0
        %p792 = scmp.eq.s32.totalorder %s42, 0
        %p793 = pnand %p791, %p792
        %p794 = pneg %p793
        // Predicated region
        $region129: #{tpu_custom_call.1} parent=91 // pred_check
          _
        $region130: #{tpu_custom_call.1} parent=91 // pred_check_branch
          %796 = sbr.rel (%p793) target = $region132
        $region131: #{tpu_custom_call.1} parent=91 // pred_region
          %vm797 = vcmask 254976
          %798 = vst.msk [vmem:[#allocation2] sm:$0x3] %vm797, 0.0
          %799 = vst.msk [vmem:[#allocation2 + $0x2] sm:$0x3] %vm797, 0.0
          %800 = vst.msk [vmem:[#allocation2 + $0x4] sm:$0x3] %vm797, 0.0
          %801 = vst.msk [vmem:[#allocation2 + $0x6] sm:$0x3] %vm797, 0.0
          %vm802 = vcmask 17408
          %803 = vst.msk [vmem:[#allocation3] sm:$0x3] %vm802, 0.0
          %804 = vst.msk [vmem:[#allocation3 + $0x2] sm:$0x3] %vm802, 0.0
          %805 = vst.msk [vmem:[#allocation3 + $0x4] sm:$0x3] %vm802, 0.0
          %806 = vst.msk [vmem:[#allocation3 + $0x6] sm:$0x3] %vm802, 0.0
        $region132: #{tpu_custom_call.1} parent=91 // pred_fallthru
          _
        %v807 = vld [vmem:[%s784] sm:$0xff]
        %v808 = vld [vmem:[%s784 + $0x8] sm:$0xff]
        %v809 = vlaneseq
        %v810 = vand.u32 %v809, 127
        %811 = vset.pattern.permute.xlu0 0
        %812 = vperm.xlu0 %811, %v807
        %v813 = vpop.permute.xlu0 %812
        %814 = vset.pattern.permute.xlu0 0
        %815 = vperm.xlu0 %814, %v808
        %v816 = vpop.permute.xlu0 %815
        %vm817 = vcmp.eq.s32.totalorder %v813, %v810
        %vm818 = vcmp.eq.s32.totalorder %v816, %v810
        %v819 = vsel %vm817, 1, 0
        %v820 = vsel %vm818, 1, 0
        %v821 = vcvt.s32.f32 %v819
        %v822 = vcvt.s32.f32 %v820
        %s823 = smul.u32 %s42, 2
        %s824 = scalar_lea.vmem [#allocation4], %s823
        %v825 = vld [vmem:[%s824] sm:$0x3]
        %s826 = scalar_lea.vmem %s5, %s823
        %v827 = vld [vmem:[%s826] sm:$0x3]
        %vm828 = vcmask 15360
        %v830 = vsel %vm828, %v821, 0
        %v833 = vsel %vm828, %v822, 0
        %vm835 = vcmask 1041408
        %v837 = vsel %vm835, %v825, 0
        %839 = vmatpush.msra.mxu0 0.0
        %840 = vmatpush.msra.mxu0 0.0
        %841 = vmatpush.msra.mxu0 0.0
        %842 = vmatpush.msra.mxu0 0.0
        %843 = vmatpush.msra.mxu0 0.0
        %844 = vmatpush.msra.mxu0 0.0
        %845 = vmatpush.msra.mxu0 0.0
        %846 = vmatpush.msra.mxu0 0.0
        %847 = vmatpush.msra.mxu0 0.0
        %848 = vmatpush.msra.mxu0 0.0
        %849 = vmatpush.msra.mxu0 0.0
        %850 = vmatpush.msra.mxu0 0.0
        %851 = vmatpush.msra.mxu0 0.0
        %852 = vmatpush.msra.mxu0 0.0
        %853 = vmatpush.msra.mxu0 0.0
        %854 = vmatpush.msra.mxu0 %v837
        %855 = vmatmul.f32.gmra.mxu0 %v830
        %v856 = vpop.f32.mrf.mxu0
        %v857 = vadd.f32 0.0, %v856
        %858 = vmatmul.f32.gmra.mxu0 %v833
        %v859 = vpop.f32.mrf.mxu0
        %v860 = vadd.f32 0.0, %v859
        %861 = vdwg.mxu0
        %v863 = vsel %vm835, %v827, 0
        %865 = vmatpush.msra.mxu0 0.0
        %866 = vmatpush.msra.mxu0 0.0
        %867 = vmatpush.msra.mxu0 0.0
        %868 = vmatpush.msra.mxu0 0.0
        %869 = vmatpush.msra.mxu0 0.0
        %870 = vmatpush.msra.mxu0 0.0
        %871 = vmatpush.msra.mxu0 0.0
        %872 = vmatpush.msra.mxu0 0.0
        %873 = vmatpush.msra.mxu0 0.0
        %874 = vmatpush.msra.mxu0 0.0
        %875 = vmatpush.msra.mxu0 0.0
        %876 = vmatpush.msra.mxu0 0.0
        %877 = vmatpush.msra.mxu0 0.0
        %878 = vmatpush.msra.mxu0 0.0
        %879 = vmatpush.msra.mxu0 0.0
        %880 = vmatpush.msra.mxu0 %v863
        %881 = vmatmul.f32.gmra.mxu0 %v830
        %v882 = vpop.f32.mrf.mxu0
        %v883 = vadd.f32 0.0, %v882
        %884 = vmatmul.f32.gmra.mxu0 %v833
        %v885 = vpop.f32.mrf.mxu0
        %v886 = vadd.f32 0.0, %v885
        %887 = vdwg.mxu0
        %v888 = vld [vmem:[%s778] sm:$0xff]
        %v889 = vld [vmem:[%s778 + $0x8] sm:$0xff]
        %v890 = vsub.f32 %v883, %v888
        %v891 = vsub.f32 %v886, %v889
        %v892 = vmul.f32 %v890, %v890
        %v893 = vmul.f32 %v891, %v891
        %vm894 = vcmask 23552
        %v895 = vsel %vm894, %v892, 0.0
        %896 = vadd.xlane.f32.xlu0 %v895
        %v897 = vpop.xlane.xlu0 %896
        %v898 = vsel %vm894, %v893, 0.0
        %899 = vadd.xlane.f32.xlu0 %v898
        %v900 = vpop.xlane.xlu0 %899
        %v901 = vrsqrt.pop %v897
        %v902 = vmul.f32 %v901, %v897
        %v903 = vmul.f32 %v902, %v901
        %v904 = vmul.f32 0.5, %v903
        %v905 = vsub.f32 1.5, %v904
        %v906 = vmul.f32 %v901, %v905
        %v907 = vmul.f32 %v897, %v906
        %vm908 = vcmp.eq.f32.partialorder %v897, inf
        %v909 = vsel %vm908, %v897, %v907
        %vm910 = vcmp.eq.f32.partialorder %v897, 0.0
        %v911 = vand.u32 %v897, 2147483648
        %v912 = vsel %vm910, %v911, %v909
        %v913 = vrsqrt.pop %v900
        %v914 = vmul.f32 %v913, %v900
        %v915 = vmul.f32 %v914, %v913
        %v916 = vmul.f32 0.5, %v915
        %v917 = vsub.f32 1.5, %v916
        %v918 = vmul.f32 %v913, %v917
        %v919 = vmul.f32 %v900, %v918
        %vm920 = vcmp.eq.f32.partialorder %v900, inf
        %v921 = vsel %vm920, %v900, %v919
        %vm922 = vcmp.eq.f32.partialorder %v900, 0.0
        %v923 = vand.u32 %v900, 2147483648
        %v924 = vsel %vm922, %v923, %v921
        %v925 = vld [vmem:[%s772] sm:$0xff]
        %v926 = vld [vmem:[%s772 + $0x8] sm:$0xff]
        %v927 = vadd.f32 %v925, %v857
        %v928 = vadd.f32 %v926, %v860
        %v929 = vld [vmem:[#allocation9] sm:$0x1]
        %v931 = vperm.slane %v929, 0
        %v933 = vmul.f32 %v912, %v931
        %v934 = vmul.f32 %v924, %v931
        %v935 = vadd.f32 %v927, %v933
        %v936 = vadd.f32 %v928, %v934
        %v937 = vxor.u32 %v935, 2147483648
        %v938 = vxor.u32 %v936, 2147483648
        %v939 = vmul.f32 %v937, 1.442695
        %v940 = vpow.pop %v939
        %v941 = vmul.f32 %v938, 1.442695
        %v942 = vpow.pop %v941
        %v943 = vadd.f32 %v940, 1.0
        %v944 = vadd.f32 %v942, 1.0
        %v945 = vrcp.pop %v943
        %v946 = vmul.f32 %v943, %v945
        %v947 = vsub.f32 1.0, %v946
        %v948 = vmul.f32 %v945, %v947
        %v949 = vadd.f32 %v945, %v948
        %vm950 = vweird.f32 %v943
        %vm951 = vweird.f32 %v945
        %vm952 = vmor %vm950, %vm951
        %v953 = vsel %vm952, %v945, %v949
        %v954 = vand.u32 2147483647, %v943
        %vm955 = vcmp.eq.f32.partialorder %v954, 8.507059e+37
        %v956 = vand.u32 %v943, 2147483648
        %v957 = vor.u32 1.1754944e-38, %v956
        %v958 = vsel %vm955, %v957, %v953
        %v959 = vmul.f32 1.0, %v958
        %v960 = vrcp.pop %v944
        %v961 = vmul.f32 %v944, %v960
        %v962 = vsub.f32 1.0, %v961
        %v963 = vmul.f32 %v960, %v962
        %v964 = vadd.f32 %v960, %v963
        %vm965 = vweird.f32 %v944
        %vm966 = vweird.f32 %v960
        %vm967 = vmor %vm965, %vm966
        %v968 = vsel %vm967, %v960, %v964
        %v969 = vand.u32 2147483647, %v944
        %vm970 = vcmp.eq.f32.partialorder %v969, 8.507059e+37
        %v971 = vand.u32 %v944, 2147483648
        %v972 = vor.u32 1.1754944e-38, %v971
        %v973 = vsel %vm970, %v972, %v968
        %v974 = vmul.f32 1.0, %v973
        %v975 = vmul.f32 %v935, %v959
        %v976 = vmul.f32 %v936, %v974
        %v977 = vpack.c.bf16 %v976, %v975
        %v978 = vld [vmem:[#allocation10] sm:$0xf]
        %v979 = vld [vmem:[#allocation10 + $0x4] sm:$0xf]
        %v980 = vld [vmem:[#allocation10 + $0x8] sm:$0xf]
        %v981 = vld [vmem:[#allocation10 + $0xc] sm:$0xf]
        %v982 = vld [vmem:[#allocation12] sm:$0x1]
        %v984 = vperm.slane %v982, 0
        %v990 = vunpack.c.l.b16 %v978
        %v991 = vunpack.c.l.b16 %v979
        %v992 = vunpack.c.l.b16 %v980
        %v993 = vunpack.c.l.b16 %v981
        %v994 = vpack.c.b16 %v991, %v990
        %v995 = vpack.c.b16 %v993, %v992
        %vm998 = vcmask 261120
        %v1000 = vsel %vm998, %v977, 0
        %1002 = vmatpush.bf16.msra.mxu0 0
        %1003 = vmatpush.bf16.msra.mxu0 0
        %1004 = vmatpush.bf16.msra.mxu0 0
        %1005 = vmatpush.bf16.msra.mxu0 0
        %1006 = vmatpush.bf16.msra.mxu0 0
        %1007 = vmatpush.bf16.msra.mxu0 0
        %1008 = vmatpush.bf16.msra.mxu0 %v995
        %1009 = vmatpush.bf16.msra.mxu0 %v994
        %1010 = vmatmul.bf16.gmra.mxu0 %v1000
        %v1011 = vpop.f32.mrf.mxu0
        %v1012 = vadd.f32 %v984, %v1011
        %v1013 = vpop.f32.mrf.mxu0
        %v1014 = vadd.f32 %v984, %v1013
        %1015 = vdwg.mxu0
        %v1016 = vxor.u32 %v1012, 2147483648
        %v1017 = vxor.u32 %v1014, 2147483648
        %v1018 = vmul.f32 %v1016, 1.442695
        %v1019 = vpow.pop %v1018
        %v1020 = vmul.f32 %v1017, 1.442695
        %v1021 = vpow.pop %v1020
        %v1022 = vadd.f32 %v1019, 1.0
        %v1023 = vadd.f32 %v1021, 1.0
        %v1024 = vrcp.pop %v1022
        %v1025 = vmul.f32 %v1022, %v1024
        %v1026 = vsub.f32 1.0, %v1025
        %v1027 = vmul.f32 %v1024, %v1026
        %v1028 = vadd.f32 %v1024, %v1027
        %vm1029 = vweird.f32 %v1022
        %vm1030 = vweird.f32 %v1024
        %vm1031 = vmor %vm1029, %vm1030
        %v1032 = vsel %vm1031, %v1024, %v1028
        %v1033 = vand.u32 2147483647, %v1022
        %vm1034 = vcmp.eq.f32.partialorder %v1033, 8.507059e+37
        %v1035 = vand.u32 %v1022, 2147483648
        %v1036 = vor.u32 1.1754944e-38, %v1035
        %v1037 = vsel %vm1034, %v1036, %v1032
        %v1038 = vmul.f32 1.0, %v1037
        %v1039 = vrcp.pop %v1023
        %v1040 = vmul.f32 %v1023, %v1039
        %v1041 = vsub.f32 1.0, %v1040
        %v1042 = vmul.f32 %v1039, %v1041
        %v1043 = vadd.f32 %v1039, %v1042
        %vm1044 = vweird.f32 %v1023
        %vm1045 = vweird.f32 %v1039
        %vm1046 = vmor %vm1044, %vm1045
        %v1047 = vsel %vm1046, %v1039, %v1043
        %v1048 = vand.u32 2147483647, %v1023
        %vm1049 = vcmp.eq.f32.partialorder %v1048, 8.507059e+37
        %v1050 = vand.u32 %v1023, 2147483648
        %v1051 = vor.u32 1.1754944e-38, %v1050
        %v1052 = vsel %vm1049, %v1051, %v1047
        %v1053 = vmul.f32 1.0, %v1052
        %v1054 = vmul.f32 %v1012, %v1038
        %v1055 = vmul.f32 %v1014, %v1053
        %v1056 = vpack.c.bf16 %v1055, %v1054
        %v1057 = vld [vmem:[#allocation13] sm:$0xf]
        %v1058 = vld [vmem:[#allocation13 + $0x4] sm:$0xf]
        %v1059 = vld [vmem:[#allocation13 + $0x8] sm:$0xf]
        %v1060 = vld [vmem:[#allocation13 + $0xc] sm:$0xf]
        %v1061 = vld [vmem:[#allocation15] sm:$0x1]
        %v1063 = vperm.slane %v1061, 0
        %v1069 = vunpack.c.l.b16 %v1057
        %v1070 = vunpack.c.l.b16 %v1058
        %v1071 = vunpack.c.l.b16 %v1059
        %v1072 = vunpack.c.l.b16 %v1060
        %v1073 = vpack.c.b16 %v1070, %v1069
        %v1074 = vpack.c.b16 %v1072, %v1071
        %v1078 = vsel %vm998, %v1056, 0
        %1080 = vmatpush.bf16.msra.mxu0 0
        %1081 = vmatpush.bf16.msra.mxu0 0
        %1082 = vmatpush.bf16.msra.mxu0 0
        %1083 = vmatpush.bf16.msra.mxu0 0
        %1084 = vmatpush.bf16.msra.mxu0 0
        %1085 = vmatpush.bf16.msra.mxu0 0
        %1086 = vmatpush.bf16.msra.mxu0 %v1074
        %1087 = vmatpush.bf16.msra.mxu0 %v1073
        %1088 = vmatmul.bf16.gmra.mxu0 %v1078
        %v1089 = vpop.f32.mrf.mxu0
        %v1090 = vadd.f32 %v1063, %v1089
        %v1091 = vpop.f32.mrf.mxu0
        %v1092 = vadd.f32 %v1063, %v1091
        %1093 = vdwg.mxu0
        %v1094 = vxor.u32 %v1090, 2147483648
        %v1095 = vxor.u32 %v1092, 2147483648
        %v1096 = vmul.f32 %v1094, 1.442695
        %v1097 = vpow.pop %v1096
        %v1098 = vmul.f32 %v1095, 1.442695
        %v1099 = vpow.pop %v1098
        %v1100 = vadd.f32 %v1097, 1.0
        %v1101 = vadd.f32 %v1099, 1.0
        %v1102 = vrcp.pop %v1100
        %v1103 = vmul.f32 %v1100, %v1102
        %v1104 = vsub.f32 1.0, %v1103
        %v1105 = vmul.f32 %v1102, %v1104
        %v1106 = vadd.f32 %v1102, %v1105
        %vm1107 = vweird.f32 %v1100
        %vm1108 = vweird.f32 %v1102
        %vm1109 = vmor %vm1107, %vm1108
        %v1110 = vsel %vm1109, %v1102, %v1106
        %v1111 = vand.u32 2147483647, %v1100
        %vm1112 = vcmp.eq.f32.partialorder %v1111, 8.507059e+37
        %v1113 = vand.u32 %v1100, 2147483648
        %v1114 = vor.u32 1.1754944e-38, %v1113
        %v1115 = vsel %vm1112, %v1114, %v1110
        %v1116 = vmul.f32 1.0, %v1115
        %v1117 = vrcp.pop %v1101
        %v1118 = vmul.f32 %v1101, %v1117
        %v1119 = vsub.f32 1.0, %v1118
        %v1120 = vmul.f32 %v1117, %v1119
        %v1121 = vadd.f32 %v1117, %v1120
        %vm1122 = vweird.f32 %v1101
        %vm1123 = vweird.f32 %v1117
        %vm1124 = vmor %vm1122, %vm1123
        %v1125 = vsel %vm1124, %v1117, %v1121
        %v1126 = vand.u32 2147483647, %v1101
        %vm1127 = vcmp.eq.f32.partialorder %v1126, 8.507059e+37
        %v1128 = vand.u32 %v1101, 2147483648
        %v1129 = vor.u32 1.1754944e-38, %v1128
        %v1130 = vsel %vm1127, %v1129, %v1125
        %v1131 = vmul.f32 1.0, %v1130
        %v1132 = vmul.f32 %v1090, %v1116
        %v1133 = vmul.f32 %v1092, %v1131
        %v1134 = vld [vmem:[#allocation16] sm:$0x1]
        %v1136 = vperm.slane %v1134, 0
        %v1138 = vmul.f32 %v1132, %v1136
        %v1139 = vmul.f32 %v1133, %v1136
        %v1140 = vsel %vm998, %v1138, 0.0
        %1141 = vadd.xlane.f32.xlu0 %v1140
        %v1142 = vpop.xlane.xlu0 %1141
        %v1143 = vsel %vm998, %v1139, 0.0
        %1144 = vadd.xlane.f32.xlu0 %v1143
        %v1145 = vpop.xlane.xlu0 %1144
        %v1146 = vmul.f32 %v890, %v1142
        %v1147 = vmul.f32 %v891, %v1145
        %s1148 = scalar_lea.vmem [#allocation2], %s823
        %v1149 = vld [vmem:[%s1148] sm:$0x3]
        %1150 = vxpose.xlu0.b32.start [1/16] %v821, 128
        %1151 = vxpose.xlu0.b32.cont [2/16] %v822, 128
        %1152 = vxpose.xlu0.b32.cont [3/16] 0.0, 128
        %1153 = vxpose.xlu0.b32.cont [4/16] 0.0, 128
        %1154 = vxpose.xlu0.b32.cont [5/16] 0.0, 128
        %1155 = vxpose.xlu0.b32.cont [6/16] 0.0, 128
        %1156 = vxpose.xlu0.b32.cont [7/16] 0.0, 128
        %1157 = vxpose.xlu0.b32.cont [8/16] 0.0, 128
        %1158 = vxpose.xlu0.b32.cont [9/16] 0.0, 128
        %1159 = vxpose.xlu0.b32.cont [10/16] 0.0, 128
        %1160 = vxpose.xlu0.b32.cont [11/16] 0.0, 128
        %1161 = vxpose.xlu0.b32.cont [12/16] 0.0, 128
        %1162 = vxpose.xlu0.b32.cont [13/16] 0.0, 128
        %1163 = vxpose.xlu0.b32.cont [14/16] 0.0, 128
        %1164 = vxpose.xlu0.b32.cont [15/16] 0.0, 128
        %1165 = vxpose.xlu0.b32.end [16/16] 0.0, 128
        %v1166 = vpop.trf.xlu0
        %v1167 = vpop.trf.xlu0
        %v1168 = vpop.trf.xlu0
        %v1169 = vpop.trf.xlu0
        %v1170 = vpop.trf.xlu0
        %v1171 = vpop.trf.xlu0
        %v1172 = vpop.trf.xlu0
        %v1173 = vpop.trf.xlu0
        %v1174 = vpop.trf.xlu0
        %v1175 = vpop.trf.xlu0
        %v1176 = vpop.trf.xlu0
        %v1177 = vpop.trf.xlu0
        %v1178 = vpop.trf.xlu0
        %v1179 = vpop.trf.xlu0
        %v1180 = vpop.trf.xlu0
        %v1181 = vpop.trf.xlu0
        %vm1182 = vcmask 130048
        %v1184 = vsel %vm1182, %v1166, 0
        %1186 = vmatpush.msra.mxu0 0.0
        %1187 = vmatpush.msra.mxu0 0.0
        %1188 = vmatpush.msra.mxu0 0.0
        %1189 = vmatpush.msra.mxu0 0.0
        %1190 = vmatpush.msra.mxu0 0.0
        %1191 = vmatpush.msra.mxu0 0.0
        %1192 = vmatpush.msra.mxu0 0.0
        %1193 = vmatpush.msra.mxu0 0.0
        %1194 = vmatpush.msra.mxu0 0.0
        %1195 = vmatpush.msra.mxu0 0.0
        %1196 = vmatpush.msra.mxu0 0.0
        %1197 = vmatpush.msra.mxu0 0.0
        %1198 = vmatpush.msra.mxu0 0.0
        %1199 = vmatpush.msra.mxu0 0.0
        %1200 = vmatpush.msra.mxu0 %v1055
        %1201 = vmatpush.msra.mxu0 %v1054
        %1202 = vmatmul.f32.gmra.mxu0 %v1184
        %v1203 = vpop.f32.mrf.mxu0
        %v1204 = vadd.f32 0.0, %v1203
        %1205 = vdwg.mxu0
        %v1206 = vadd.f32 %v1149, %v1204
        %vm1207 = vcmask 254976
        %1208 = vst.msk [vmem:[%s1148] sm:$0x3] %vm1207, %v1206
        %s1209 = scalar_lea.vmem [#allocation3], %s823
        %v1210 = vld [vmem:[%s1209] sm:$0x3]
        %1211 = vmatpush.msra.mxu0 0.0
        %1212 = vmatpush.msra.mxu0 0.0
        %1213 = vmatpush.msra.mxu0 0.0
        %1214 = vmatpush.msra.mxu0 0.0
        %1215 = vmatpush.msra.mxu0 0.0
        %1216 = vmatpush.msra.mxu0 0.0
        %1217 = vmatpush.msra.mxu0 0.0
        %1218 = vmatpush.msra.mxu0 0.0
        %1219 = vmatpush.msra.mxu0 0.0
        %1220 = vmatpush.msra.mxu0 0.0
        %1221 = vmatpush.msra.mxu0 0.0
        %1222 = vmatpush.msra.mxu0 0.0
        %1223 = vmatpush.msra.mxu0 0.0
        %1224 = vmatpush.msra.mxu0 0.0
        %1225 = vmatpush.msra.mxu0 %v1147
        %1226 = vmatpush.msra.mxu0 %v1146
        %1227 = vmatmul.f32.gmra.mxu0 %v1184
        %v1228 = vpop.f32.mrf.mxu0
        %v1229 = vadd.f32 0.0, %v1228
        %1230 = vdwg.mxu0
        %v1231 = vadd.f32 %v1210, %v1229
        %vm1232 = vcmask 17408
        %1233 = vst.msk [vmem:[%s1209] sm:$0x3] %vm1232, %v1231
        // Predicated region
        $region133: #{tpu_custom_call.1} parent=91 // pred_check
          _
        $region134: #{tpu_custom_call.1} parent=91 // pred_check_branch
          %1235 = sbr.rel (%p789) target = $region136
        $region135: #{tpu_custom_call.1} parent=91 // pred_region
          %v1236 = vld [vmem:[%s6] sm:$0x3]
          %v1237 = vld [vmem:[#allocation2] sm:$0x3]
          %1239 = vset.pattern.permute.xlu0 0
          %1240 = vperm.xlu0 %1239, %v1236
          %v1241 = vpop.permute.xlu0 %1240
          %v1243 = vmul.f32 %v1237, %v1241
          %v1244 = vld [vmem:[%s5] sm:$0x3]
          %v1245 = vld [vmem:[#allocation3] sm:$0x3]
          %v1246 = vmul.f32 %v1245, %v1241
          %v1247 = vadd.f32 %v1244, %v1246
          %1248 = vst.msk [vmem:[%s19] sm:$0x3] %vm1232, %v1247
          %v1249 = vld [vmem:[#allocation7] sm:$0x3]
          %v1250 = vld [vmem:[%s13] sm:$0xff]
          %v1251 = vld [vmem:[%s13 + $0x8] sm:$0xff]
          %v1252 = vld [vmem:[%s13 + $0x10] sm:$0xff]
          %v1253 = vld [vmem:[%s13 + $0x18] sm:$0xff]
          %v1254 = vld [vmem:[%s14] sm:$0xff]
          %v1255 = vld [vmem:[%s14 + $0x8] sm:$0xff]
          %v1256 = vld [vmem:[%s14 + $0x10] sm:$0xff]
          %v1257 = vld [vmem:[%s14 + $0x18] sm:$0xff]
          %v1259 = vsel %vm998, %v1243, 0
          %1261 = vmatpush.msra.mxu0 0.0
          %1262 = vmatpush.msra.mxu0 0.0
          %1263 = vmatpush.msra.mxu0 0.0
          %1264 = vmatpush.msra.mxu0 0.0
          %1265 = vmatpush.msra.mxu0 0.0
          %1266 = vmatpush.msra.mxu0 0.0
          %1267 = vmatpush.msra.mxu0 0.0
          %1268 = vmatpush.msra.mxu0 0.0
          %1269 = vmatpush.msra.mxu0 0.0
          %1270 = vmatpush.msra.mxu0 0.0
          %1271 = vmatpush.msra.mxu0 0.0
          %1272 = vmatpush.msra.mxu0 0.0
          %1273 = vmatpush.msra.mxu0 %v1257
          %1274 = vmatpush.msra.mxu0 %v1256
          %1275 = vmatpush.msra.mxu0 %v1255
          %1276 = vmatpush.msra.mxu0 %v1254
          %1277 = vmatmul.f32.gmra.mxu0 %v1259
          %v1278 = vpop.f32.mrf.mxu0
          %v1279 = vadd.f32 0.0, %v1278
          %1280 = vdwg.mxu0
          %v1282 = vsel %vm998, %v1249, 0
          %1284 = vmatpush.msra.mxu0 0.0
          %1285 = vmatpush.msra.mxu0 0.0
          %1286 = vmatpush.msra.mxu0 0.0
          %1287 = vmatpush.msra.mxu0 0.0
          %1288 = vmatpush.msra.mxu0 0.0
          %1289 = vmatpush.msra.mxu0 0.0
          %1290 = vmatpush.msra.mxu0 0.0
          %1291 = vmatpush.msra.mxu0 0.0
          %1292 = vmatpush.msra.mxu0 0.0
          %1293 = vmatpush.msra.mxu0 0.0
          %1294 = vmatpush.msra.mxu0 0.0
          %1295 = vmatpush.msra.mxu0 0.0
          %1296 = vmatpush.msra.mxu0 %v1253
          %1297 = vmatpush.msra.mxu0 %v1252
          %1298 = vmatpush.msra.mxu0 %v1251
          %1299 = vmatpush.msra.mxu0 %v1250
          %1300 = vmatmul.f32.gmra.mxu0 %v1282
          %v1301 = vpop.f32.mrf.mxu0
          %v1302 = vadd.f32 %v1279, %v1301
          %1303 = vdwg.mxu0
          %v1304 = vld [vmem:[%s15] sm:$0x1]
          %v1306 = vperm.slane %v1304, 0
          %v1308 = vadd.f32 %v1302, %v1306
          %v1309 = vxor.u32 %v1308, 2147483648
          %v1310 = vmul.f32 %v1309, 1.442695
          %v1311 = vpow.pop %v1310
          %v1312 = vadd.f32 %v1311, 1.0
          %v1313 = vrcp.pop %v1312
          %v1314 = vmul.f32 %v1312, %v1313
          %v1315 = vsub.f32 1.0, %v1314
          %v1316 = vmul.f32 %v1313, %v1315
          %v1317 = vadd.f32 %v1313, %v1316
          %vm1318 = vweird.f32 %v1312
          %vm1319 = vweird.f32 %v1313
          %vm1320 = vmor %vm1318, %vm1319
          %v1321 = vsel %vm1320, %v1313, %v1317
          %v1322 = vand.u32 2147483647, %v1312
          %vm1323 = vcmp.eq.f32.partialorder %v1322, 8.507059e+37
          %v1324 = vand.u32 %v1312, 2147483648
          %v1325 = vor.u32 1.1754944e-38, %v1324
          %v1326 = vsel %vm1323, %v1325, %v1321
          %v1327 = vmul.f32 1.0, %v1326
          %v1328 = vmul.f32 %v1308, %v1327
          %v1329 = vld [vmem:[#allocation18] sm:$0xff]
          %v1330 = vld [vmem:[#allocation18 + $0x8] sm:$0xff]
          %v1331 = vld [vmem:[#allocation18 + $0x10] sm:$0xff]
          %v1332 = vld [vmem:[#allocation18 + $0x18] sm:$0xff]
          %v1333 = vld [vmem:[%s17] sm:$0x1]
          %v1335 = vperm.slane %v1333, 0
          %v1338 = vsel %vm998, %v1328, 0
          %1340 = vmatpush.msra.mxu0 0.0
          %1341 = vmatpush.msra.mxu0 0.0
          %1342 = vmatpush.msra.mxu0 0.0
          %1343 = vmatpush.msra.mxu0 0.0
          %1344 = vmatpush.msra.mxu0 0.0
          %1345 = vmatpush.msra.mxu0 0.0
          %1346 = vmatpush.msra.mxu0 0.0
          %1347 = vmatpush.msra.mxu0 0.0
          %1348 = vmatpush.msra.mxu0 0.0
          %1349 = vmatpush.msra.mxu0 0.0
          %1350 = vmatpush.msra.mxu0 0.0
          %1351 = vmatpush.msra.mxu0 0.0
          %1352 = vmatpush.msra.mxu0 %v1332
          %1353 = vmatpush.msra.mxu0 %v1331
          %1354 = vmatpush.msra.mxu0 %v1330
          %1355 = vmatpush.msra.mxu0 %v1329
          %1356 = vmatmul.f32.gmra.mxu0 %v1338
          %v1357 = vpop.f32.mrf.mxu0
          %v1358 = vadd.f32 %v1335, %v1357
          %1359 = vdwg.mxu0
          %v1360 = vadd.f32 %v1249, %v1358
          %1361 = vst.msk [vmem:[#allocation19] sm:$0x3] %vm1207, %v1360
          %s1362 = scalar_lea.vmem [#allocation2], 2
          %v1363 = vld [vmem:[%s1362] sm:$0x3]
          %v1364 = vmul.f32 %v1363, %v1241
          %s1365 = scalar_lea.vmem %s5, 2
          %v1366 = vld [vmem:[%s1365] sm:$0x3]
          %s1367 = scalar_lea.vmem [#allocation3], 2
          %v1368 = vld [vmem:[%s1367] sm:$0x3]
          %v1369 = vmul.f32 %v1368, %v1241
          %v1370 = vadd.f32 %v1366, %v1369
          %s1371 = scalar_lea.vmem %s19, 2
          %1372 = vst.msk [vmem:[%s1371] sm:$0x3] %vm1232, %v1370
          %s1373 = scalar_lea.vmem [#allocation7], 2
          %v1374 = vld [vmem:[%s1373] sm:$0x3]
          %v1375 = vld [vmem:[%s13] sm:$0xff]
          %v1376 = vld [vmem:[%s13 + $0x8] sm:$0xff]
          %v1377 = vld [vmem:[%s13 + $0x10] sm:$0xff]
          %v1378 = vld [vmem:[%s13 + $0x18] sm:$0xff]
          %v1379 = vld [vmem:[%s14] sm:$0xff]
          %v1380 = vld [vmem:[%s14 + $0x8] sm:$0xff]
          %v1381 = vld [vmem:[%s14 + $0x10] sm:$0xff]
          %v1382 = vld [vmem:[%s14 + $0x18] sm:$0xff]
          %v1384 = vsel %vm998, %v1364, 0
          %1386 = vmatpush.msra.mxu0 0.0
          %1387 = vmatpush.msra.mxu0 0.0
          %1388 = vmatpush.msra.mxu0 0.0
          %1389 = vmatpush.msra.mxu0 0.0
          %1390 = vmatpush.msra.mxu0 0.0
          %1391 = vmatpush.msra.mxu0 0.0
          %1392 = vmatpush.msra.mxu0 0.0
          %1393 = vmatpush.msra.mxu0 0.0
          %1394 = vmatpush.msra.mxu0 0.0
          %1395 = vmatpush.msra.mxu0 0.0
          %1396 = vmatpush.msra.mxu0 0.0
          %1397 = vmatpush.msra.mxu0 0.0
          %1398 = vmatpush.msra.mxu0 %v1382
          %1399 = vmatpush.msra.mxu0 %v1381
          %1400 = vmatpush.msra.mxu0 %v1380
          %1401 = vmatpush.msra.mxu0 %v1379
          %1402 = vmatmul.f32.gmra.mxu0 %v1384
          %v1403 = vpop.f32.mrf.mxu0
          %v1404 = vadd.f32 0.0, %v1403
          %1405 = vdwg.mxu0
          %v1407 = vsel %vm998, %v1374, 0
          %1409 = vmatpush.msra.mxu0 0.0
          %1410 = vmatpush.msra.mxu0 0.0
          %1411 = vmatpush.msra.mxu0 0.0
          %1412 = vmatpush.msra.mxu0 0.0
          %1413 = vmatpush.msra.mxu0 0.0
          %1414 = vmatpush.msra.mxu0 0.0
          %1415 = vmatpush.msra.mxu0 0.0
          %1416 = vmatpush.msra.mxu0 0.0
          %1417 = vmatpush.msra.mxu0 0.0
          %1418 = vmatpush.msra.mxu0 0.0
          %1419 = vmatpush.msra.mxu0 0.0
          %1420 = vmatpush.msra.mxu0 0.0
          %1421 = vmatpush.msra.mxu0 %v1378
          %1422 = vmatpush.msra.mxu0 %v1377
          %1423 = vmatpush.msra.mxu0 %v1376
          %1424 = vmatpush.msra.mxu0 %v1375
          %1425 = vmatmul.f32.gmra.mxu0 %v1407
          %v1426 = vpop.f32.mrf.mxu0
          %v1427 = vadd.f32 %v1404, %v1426
          %1428 = vdwg.mxu0
          %v1429 = vld [vmem:[%s15] sm:$0x1]
          %v1431 = vperm.slane %v1429, 0
          %v1433 = vadd.f32 %v1427, %v1431
          %v1434 = vxor.u32 %v1433, 2147483648
          %v1435 = vmul.f32 %v1434, 1.442695
          %v1436 = vpow.pop %v1435
          %v1437 = vadd.f32 %v1436, 1.0
          %v1438 = vrcp.pop %v1437
          %v1439 = vmul.f32 %v1437, %v1438
          %v1440 = vsub.f32 1.0, %v1439
          %v1441 = vmul.f32 %v1438, %v1440
          %v1442 = vadd.f32 %v1438, %v1441
          %vm1443 = vweird.f32 %v1437
          %vm1444 = vweird.f32 %v1438
          %vm1445 = vmor %vm1443, %vm1444
          %v1446 = vsel %vm1445, %v1438, %v1442
          %v1447 = vand.u32 2147483647, %v1437
          %vm1448 = vcmp.eq.f32.partialorder %v1447, 8.507059e+37
          %v1449 = vand.u32 %v1437, 2147483648
          %v1450 = vor.u32 1.1754944e-38, %v1449
          %v1451 = vsel %vm1448, %v1450, %v1446
          %v1452 = vmul.f32 1.0, %v1451
          %v1453 = vmul.f32 %v1433, %v1452
          %v1454 = vld [vmem:[#allocation18] sm:$0xff]
          %v1455 = vld [vmem:[#allocation18 + $0x8] sm:$0xff]
          %v1456 = vld [vmem:[#allocation18 + $0x10] sm:$0xff]
          %v1457 = vld [vmem:[#allocation18 + $0x18] sm:$0xff]
          %v1458 = vld [vmem:[%s17] sm:$0x1]
          %v1460 = vperm.slane %v1458, 0
          %v1463 = vsel %vm998, %v1453, 0
          %1465 = vmatpush.msra.mxu0 0.0
          %1466 = vmatpush.msra.mxu0 0.0
          %1467 = vmatpush.msra.mxu0 0.0
          %1468 = vmatpush.msra.mxu0 0.0
          %1469 = vmatpush.msra.mxu0 0.0
          %1470 = vmatpush.msra.mxu0 0.0
          %1471 = vmatpush.msra.mxu0 0.0
          %1472 = vmatpush.msra.mxu0 0.0
          %1473 = vmatpush.msra.mxu0 0.0
          %1474 = vmatpush.msra.mxu0 0.0
          %1475 = vmatpush.msra.mxu0 0.0
          %1476 = vmatpush.msra.mxu0 0.0
          %1477 = vmatpush.msra.mxu0 %v1457
          %1478 = vmatpush.msra.mxu0 %v1456
          %1479 = vmatpush.msra.mxu0 %v1455
          %1480 = vmatpush.msra.mxu0 %v1454
          %1481 = vmatmul.f32.gmra.mxu0 %v1463
          %v1482 = vpop.f32.mrf.mxu0
          %v1483 = vadd.f32 %v1460, %v1482
          %1484 = vdwg.mxu0
          %v1485 = vadd.f32 %v1374, %v1483
          %s1486 = scalar_lea.vmem [#allocation19], 2
          %1487 = vst.msk [vmem:[%s1486] sm:$0x3] %vm1207, %v1485
          %s1488 = scalar_lea.vmem [#allocation2], 4
          %v1489 = vld [vmem:[%s1488] sm:$0x3]
          %v1490 = vmul.f32 %v1489, %v1241
          %s1491 = scalar_lea.vmem %s5, 4
          %v1492 = vld [vmem:[%s1491] sm:$0x3]
          %s1493 = scalar_lea.vmem [#allocation3], 4
          %v1494 = vld [vmem:[%s1493] sm:$0x3]
          %v1495 = vmul.f32 %v1494, %v1241
          %v1496 = vadd.f32 %v1492, %v1495
          %s1497 = scalar_lea.vmem %s19, 4
          %1498 = vst.msk [vmem:[%s1497] sm:$0x3] %vm1232, %v1496
          %s1499 = scalar_lea.vmem [#allocation7], 4
          %v1500 = vld [vmem:[%s1499] sm:$0x3]
          %v1501 = vld [vmem:[%s13] sm:$0xff]
          %v1502 = vld [vmem:[%s13 + $0x8] sm:$0xff]
          %v1503 = vld [vmem:[%s13 + $0x10] sm:$0xff]
          %v1504 = vld [vmem:[%s13 + $0x18] sm:$0xff]
          %v1505 = vld [vmem:[%s14] sm:$0xff]
          %v1506 = vld [vmem:[%s14 + $0x8] sm:$0xff]
          %v1507 = vld [vmem:[%s14 + $0x10] sm:$0xff]
          %v1508 = vld [vmem:[%s14 + $0x18] sm:$0xff]
          %v1510 = vsel %vm998, %v1490, 0
          %1512 = vmatpush.msra.mxu0 0.0
          %1513 = vmatpush.msra.mxu0 0.0
          %1514 = vmatpush.msra.mxu0 0.0
          %1515 = vmatpush.msra.mxu0 0.0
          %1516 = vmatpush.msra.mxu0 0.0
          %1517 = vmatpush.msra.mxu0 0.0
          %1518 = vmatpush.msra.mxu0 0.0
          %1519 = vmatpush.msra.mxu0 0.0
          %1520 = vmatpush.msra.mxu0 0.0
          %1521 = vmatpush.msra.mxu0 0.0
          %1522 = vmatpush.msra.mxu0 0.0
          %1523 = vmatpush.msra.mxu0 0.0
          %1524 = vmatpush.msra.mxu0 %v1508
          %1525 = vmatpush.msra.mxu0 %v1507
          %1526 = vmatpush.msra.mxu0 %v1506
          %1527 = vmatpush.msra.mxu0 %v1505
          %1528 = vmatmul.f32.gmra.mxu0 %v1510
          %v1529 = vpop.f32.mrf.mxu0
          %v1530 = vadd.f32 0.0, %v1529
          %1531 = vdwg.mxu0
          %v1533 = vsel %vm998, %v1500, 0
          %1535 = vmatpush.msra.mxu0 0.0
          %1536 = vmatpush.msra.mxu0 0.0
          %1537 = vmatpush.msra.mxu0 0.0
          %1538 = vmatpush.msra.mxu0 0.0
          %1539 = vmatpush.msra.mxu0 0.0
          %1540 = vmatpush.msra.mxu0 0.0
          %1541 = vmatpush.msra.mxu0 0.0
          %1542 = vmatpush.msra.mxu0 0.0
          %1543 = vmatpush.msra.mxu0 0.0
          %1544 = vmatpush.msra.mxu0 0.0
          %1545 = vmatpush.msra.mxu0 0.0
          %1546 = vmatpush.msra.mxu0 0.0
          %1547 = vmatpush.msra.mxu0 %v1504
          %1548 = vmatpush.msra.mxu0 %v1503
          %1549 = vmatpush.msra.mxu0 %v1502
          %1550 = vmatpush.msra.mxu0 %v1501
          %1551 = vmatmul.f32.gmra.mxu0 %v1533
          %v1552 = vpop.f32.mrf.mxu0
          %v1553 = vadd.f32 %v1530, %v1552
          %1554 = vdwg.mxu0
          %v1555 = vld [vmem:[%s15] sm:$0x1]
          %v1557 = vperm.slane %v1555, 0
          %v1559 = vadd.f32 %v1553, %v1557
          %v1560 = vxor.u32 %v1559, 2147483648
          %v1561 = vmul.f32 %v1560, 1.442695
          %v1562 = vpow.pop %v1561
          %v1563 = vadd.f32 %v1562, 1.0
          %v1564 = vrcp.pop %v1563
          %v1565 = vmul.f32 %v1563, %v1564
          %v1566 = vsub.f32 1.0, %v1565
          %v1567 = vmul.f32 %v1564, %v1566
          %v1568 = vadd.f32 %v1564, %v1567
          %vm1569 = vweird.f32 %v1563
          %vm1570 = vweird.f32 %v1564
          %vm1571 = vmor %vm1569, %vm1570
          %v1572 = vsel %vm1571, %v1564, %v1568
          %v1573 = vand.u32 2147483647, %v1563
          %vm1574 = vcmp.eq.f32.partialorder %v1573, 8.507059e+37
          %v1575 = vand.u32 %v1563, 2147483648
          %v1576 = vor.u32 1.1754944e-38, %v1575
          %v1577 = vsel %vm1574, %v1576, %v1572
          %v1578 = vmul.f32 1.0, %v1577
          %v1579 = vmul.f32 %v1559, %v1578
          %v1580 = vld [vmem:[#allocation18] sm:$0xff]
          %v1581 = vld [vmem:[#allocation18 + $0x8] sm:$0xff]
          %v1582 = vld [vmem:[#allocation18 + $0x10] sm:$0xff]
          %v1583 = vld [vmem:[#allocation18 + $0x18] sm:$0xff]
          %v1584 = vld [vmem:[%s17] sm:$0x1]
          %v1586 = vperm.slane %v1584, 0
          %v1589 = vsel %vm998, %v1579, 0
          %1591 = vmatpush.msra.mxu0 0.0
          %1592 = vmatpush.msra.mxu0 0.0
          %1593 = vmatpush.msra.mxu0 0.0
          %1594 = vmatpush.msra.mxu0 0.0
          %1595 = vmatpush.msra.mxu0 0.0
          %1596 = vmatpush.msra.mxu0 0.0
          %1597 = vmatpush.msra.mxu0 0.0
          %1598 = vmatpush.msra.mxu0 0.0
          %1599 = vmatpush.msra.mxu0 0.0
          %1600 = vmatpush.msra.mxu0 0.0
          %1601 = vmatpush.msra.mxu0 0.0
          %1602 = vmatpush.msra.mxu0 0.0
          %1603 = vmatpush.msra.mxu0 %v1583
          %1604 = vmatpush.msra.mxu0 %v1582
          %1605 = vmatpush.msra.mxu0 %v1581
          %1606 = vmatpush.msra.mxu0 %v1580
          %1607 = vmatmul.f32.gmra.mxu0 %v1589
          %v1608 = vpop.f32.mrf.mxu0
          %v1609 = vadd.f32 %v1586, %v1608
          %1610 = vdwg.mxu0
          %v1611 = vadd.f32 %v1500, %v1609
          %s1612 = scalar_lea.vmem [#allocation19], 4
          %1613 = vst.msk [vmem:[%s1612] sm:$0x3] %vm1207, %v1611
          %s1614 = scalar_lea.vmem [#allocation2], 6
          %v1615 = vld [vmem:[%s1614] sm:$0x3]
          %v1616 = vmul.f32 %v1615, %v1241
          %s1617 = scalar_lea.vmem %s5, 6
          %v1618 = vld [vmem:[%s1617] sm:$0x3]
          %s1619 = scalar_lea.vmem [#allocation3], 6
          %v1620 = vld [vmem:[%s1619] sm:$0x3]
          %v1621 = vmul.f32 %v1620, %v1241
          %v1622 = vadd.f32 %v1618, %v1621
          %s1623 = scalar_lea.vmem %s19, 6
          %1624 = vst.msk [vmem:[%s1623] sm:$0x3] %vm1232, %v1622
          %s1625 = scalar_lea.vmem [#allocation7], 6
          %v1626 = vld [vmem:[%s1625] sm:$0x3]
          %v1627 = vld [vmem:[%s13] sm:$0xff]
          %v1628 = vld [vmem:[%s13 + $0x8] sm:$0xff]
          %v1629 = vld [vmem:[%s13 + $0x10] sm:$0xff]
          %v1630 = vld [vmem:[%s13 + $0x18] sm:$0xff]
          %v1631 = vld [vmem:[%s14] sm:$0xff]
          %v1632 = vld [vmem:[%s14 + $0x8] sm:$0xff]
          %v1633 = vld [vmem:[%s14 + $0x10] sm:$0xff]
          %v1634 = vld [vmem:[%s14 + $0x18] sm:$0xff]
          %v1636 = vsel %vm998, %v1616, 0
          %1638 = vmatpush.msra.mxu0 0.0
          %1639 = vmatpush.msra.mxu0 0.0
          %1640 = vmatpush.msra.mxu0 0.0
          %1641 = vmatpush.msra.mxu0 0.0
          %1642 = vmatpush.msra.mxu0 0.0
          %1643 = vmatpush.msra.mxu0 0.0
          %1644 = vmatpush.msra.mxu0 0.0
          %1645 = vmatpush.msra.mxu0 0.0
          %1646 = vmatpush.msra.mxu0 0.0
          %1647 = vmatpush.msra.mxu0 0.0
          %1648 = vmatpush.msra.mxu0 0.0
          %1649 = vmatpush.msra.mxu0 0.0
          %1650 = vmatpush.msra.mxu0 %v1634
          %1651 = vmatpush.msra.mxu0 %v1633
          %1652 = vmatpush.msra.mxu0 %v1632
          %1653 = vmatpush.msra.mxu0 %v1631
          %1654 = vmatmul.f32.gmra.mxu0 %v1636
          %v1655 = vpop.f32.mrf.mxu0
          %v1656 = vadd.f32 0.0, %v1655
          %1657 = vdwg.mxu0
          %v1659 = vsel %vm998, %v1626, 0
          %1661 = vmatpush.msra.mxu0 0.0
          %1662 = vmatpush.msra.mxu0 0.0
          %1663 = vmatpush.msra.mxu0 0.0
          %1664 = vmatpush.msra.mxu0 0.0
          %1665 = vmatpush.msra.mxu0 0.0
          %1666 = vmatpush.msra.mxu0 0.0
          %1667 = vmatpush.msra.mxu0 0.0
          %1668 = vmatpush.msra.mxu0 0.0
          %1669 = vmatpush.msra.mxu0 0.0
          %1670 = vmatpush.msra.mxu0 0.0
          %1671 = vmatpush.msra.mxu0 0.0
          %1672 = vmatpush.msra.mxu0 0.0
          %1673 = vmatpush.msra.mxu0 %v1630
          %1674 = vmatpush.msra.mxu0 %v1629
          %1675 = vmatpush.msra.mxu0 %v1628
          %1676 = vmatpush.msra.mxu0 %v1627
          %1677 = vmatmul.f32.gmra.mxu0 %v1659
          %v1678 = vpop.f32.mrf.mxu0
          %v1679 = vadd.f32 %v1656, %v1678
          %1680 = vdwg.mxu0
          %v1681 = vld [vmem:[%s15] sm:$0x1]
          %v1683 = vperm.slane %v1681, 0
          %v1685 = vadd.f32 %v1679, %v1683
          %v1686 = vxor.u32 %v1685, 2147483648
          %v1687 = vmul.f32 %v1686, 1.442695
          %v1688 = vpow.pop %v1687
          %v1689 = vadd.f32 %v1688, 1.0
          %v1690 = vrcp.pop %v1689
          %v1691 = vmul.f32 %v1689, %v1690
          %v1692 = vsub.f32 1.0, %v1691
          %v1693 = vmul.f32 %v1690, %v1692
          %v1694 = vadd.f32 %v1690, %v1693
          %vm1695 = vweird.f32 %v1689
          %vm1696 = vweird.f32 %v1690
          %vm1697 = vmor %vm1695, %vm1696
          %v1698 = vsel %vm1697, %v1690, %v1694
          %v1699 = vand.u32 2147483647, %v1689
          %vm1700 = vcmp.eq.f32.partialorder %v1699, 8.507059e+37
          %v1701 = vand.u32 %v1689, 2147483648
          %v1702 = vor.u32 1.1754944e-38, %v1701
          %v1703 = vsel %vm1700, %v1702, %v1698
          %v1704 = vmul.f32 1.0, %v1703
          %v1705 = vmul.f32 %v1685, %v1704
          %v1706 = vld [vmem:[#allocation18] sm:$0xff]
          %v1707 = vld [vmem:[#allocation18 + $0x8] sm:$0xff]
          %v1708 = vld [vmem:[#allocation18 + $0x10] sm:$0xff]
          %v1709 = vld [vmem:[#allocation18 + $0x18] sm:$0xff]
          %v1710 = vld [vmem:[%s17] sm:$0x1]
          %v1712 = vperm.slane %v1710, 0
          %v1715 = vsel %vm998, %v1705, 0
          %1717 = vmatpush.msra.mxu0 0.0
          %1718 = vmatpush.msra.mxu0 0.0
          %1719 = vmatpush.msra.mxu0 0.0
          %1720 = vmatpush.msra.mxu0 0.0
          %1721 = vmatpush.msra.mxu0 0.0
          %1722 = vmatpush.msra.mxu0 0.0
          %1723 = vmatpush.msra.mxu0 0.0
          %1724 = vmatpush.msra.mxu0 0.0
          %1725 = vmatpush.msra.mxu0 0.0
          %1726 = vmatpush.msra.mxu0 0.0
          %1727 = vmatpush.msra.mxu0 0.0
          %1728 = vmatpush.msra.mxu0 0.0
          %1729 = vmatpush.msra.mxu0 %v1709
          %1730 = vmatpush.msra.mxu0 %v1708
          %1731 = vmatpush.msra.mxu0 %v1707
          %1732 = vmatpush.msra.mxu0 %v1706
          %1733 = vmatmul.f32.gmra.mxu0 %v1715
          %v1734 = vpop.f32.mrf.mxu0
          %v1735 = vadd.f32 %v1712, %v1734
          %1736 = vdwg.mxu0
          %v1737 = vadd.f32 %v1626, %v1735
          %s1738 = scalar_lea.vmem [#allocation19], 6
          %1739 = vst.msk [vmem:[%s1738] sm:$0x3] %vm1207, %v1737
        $region136: #{tpu_custom_call.1} parent=91 // pred_fallthru
          _
        // Predicated region
        $region137: #{tpu_custom_call.1} parent=91 // pred_check
          %p1740 = pneg %p455
        $region138: #{tpu_custom_call.1} parent=91 // pred_check_branch
          %1742 = sbr.rel (%p1740) target = $region140
        $region139: #{tpu_custom_call.1} parent=91 // pred_region
          %1744 = vsyncadd [#allocation6], 0
          %s1745 = sshll.u32 [#allocation19], 4
          %s1746 = int_to_ptr.vmem [resolvable:$true] %s1745
          %s1747 = sshll.u32 %s18, 4
          %s1748 = int_to_ptr.hbm [resolvable:$true] %s1747
          %1753 = dma.vmem_to_hbm [thread:$0]  %s1746, 128, %s1748, [#allocation6], 32, 32, 2
        $region140: #{tpu_custom_call.1} parent=91 // pred_fallthru
          _
        // Predicated region
        $region141: #{tpu_custom_call.1} parent=91 // pred_check
          %p1754 = pneg %p476
        $region142: #{tpu_custom_call.1} parent=91 // pred_check_branch
          %1756 = sbr.rel (%p1754) target = $region144
        $region143: #{tpu_custom_call.1} parent=91 // pred_region
          _
        $region144: #{tpu_custom_call.1} parent=91 // pred_fallthru
          _
        // Predicated region
        $region145: #{tpu_custom_call.1} parent=91 // pred_check
          %p1757 = pneg %p455
        $region146: #{tpu_custom_call.1} parent=91 // pred_check_branch
          %1759 = sbr.rel (%p1757) target = $region148
        $region147: #{tpu_custom_call.1} parent=91 // pred_region
          %1761 = dma.done [#allocation6], 128
        $region148: #{tpu_custom_call.1} parent=91 // pred_fallthru
          _
        // Predicated region
        $region149: #{tpu_custom_call.1} parent=91 // pred_check
          %p1762 = pneg %p476
        $region150: #{tpu_custom_call.1} parent=91 // pred_check_branch
          %1764 = sbr.rel (%p1762) target = $region152
        $region151: #{tpu_custom_call.1} parent=91 // pred_region
          _
        $region152: #{tpu_custom_call.1} parent=91 // pred_fallthru
          _
      $region92: #{tpu_custom_call.1} parent=5 // pred_fallthru
        _
      %p1765 = scmp.le.s32.totalorder 2, %s32
      // Predicated region
      $region153: #{tpu_custom_call.1} parent=5 // pred_check
        %p1766 = pneg %p1765
      $region154: #{tpu_custom_call.1} parent=5 // pred_check_branch
        %1768 = sbr.rel (%p1766) target = $region156
      $region155: #{tpu_custom_call.1} parent=5 // pred_region
        %s1769 = ssub.s32 %s32, 2
      $region156: #{tpu_custom_call.1} parent=5 // pred_fallthru
        _
    $region6: #{tpu_custom_call.1} parent=1 // loop_footer
      %s36 = sadd.s32 1, %s32
    $region7: #{tpu_custom_call.1} parent=1 // loop_footer_branch
      %31 = sbr.rel target = $region3
    $region8: #{tpu_custom_call.1} parent=1 // loop_exit
      _
    %1770 = vsyncpa [#allocation5], 1
    %s1771 = scalar_lea.sflag [#allocation5], 1
    %1772 = vsyncpa %s1771, 1
    %1773 = vsyncpa [#allocation8], 1
    %1774 = vsyncpa [#allocation11], 1
    %1775 = vsyncpa [#allocation14], 1
    %1776 = vsyncpa [#allocation17], 1
    %1777 = vsyncpa [#allocation6], 1
    %s1778 = scalar_lea.sflag [#allocation6], 1
    %1779 = vsyncpa %s1778, 1

</llo_original>
